<compile_context>
chip_gen: v7x
topology: tpu7x:2x2x1
jax: 0.10.0
libtpu: 0.0.40
codegen_flags: <defaults>
</compile_context>

<pallas_src>
import functools

import jax
import jax.numpy as jnp
import numpy as np
from jax.experimental import pallas as pl
from jax.experimental.pallas import tpu as pltpu

# Problem sizes (small, consistent with the module's forward).
B = 2          # batch
N = 16         # number of nodes / tokens
C = 32         # in_features
K = 9          # num_edges (top-k neighbors)
HID2 = 4 * C   # hidden width of in_layer2 / out_layer2 (folded away by fusion)

MXU_DTYPE = jnp.float32        # flip to jnp.bfloat16 on v6e/v7x (bytes-moved win)
GELU_APPROXIMATE = False       # False = exact erf GELU (torch F.gelu semantics)


# ------------------------------ in-kernel helpers ------------------------------
def _erf(x):
    # Abramowitz & Stegun 7.1.26 (max abs error 1.5e-7): exp -> EUP, rest VPU.
    p = jnp.float32(0.3275911)
    a1 = jnp.float32(0.254829592)
    a2 = jnp.float32(-0.284496736)
    a3 = jnp.float32(1.421413741)
    a4 = jnp.float32(-1.453152027)
    a5 = jnp.float32(1.061405429)
    ax = jnp.abs(x)
    t = 1.0 / (1.0 + p * ax)
    poly = ((((a5 * t + a4) * t + a3) * t + a2) * t + a1) * t
    y = 1.0 - poly * jnp.exp(-ax * ax)
    return jnp.where(x >= 0, y, -y)


def _gelu(x):
    if GELU_APPROXIMATE:
        return jax.nn.gelu(x, approximate=True)        # tanh -> single EUP push
    return 0.5 * x * (1.0 + _erf(x * jnp.float32(0.7071067811865476)))


# ---------------------------------- kernel ----------------------------------
def vig_block_kernel(k, n, slab_ref, x_ref, out_ref):
    """One grid step: ViGBlock forward for bpg = rows // n independent images.

    slab_ref rows: [0:C)    fused in_layer1        (C, C)
                   [C:3C)   de-interleaved fc      (2C, C)  acts on [y | agg]
                   [3C:4C)  fused out_layer1       (C, C)
                   [4C:5C)  fused in_layer2        (C, C)
                   [5C:6C)  fused out_layer2       (C, C)
                   rows 6C..6C+4 = biases b1, bfc, bo1, bi2, bo2 (then padding).
    """
    rows, c = x_ref.shape
    bpg = rows // n
    cdt = slab_ref.dtype                      # MXU operand dtype (f32 or bf16)

    xf = x_ref[...]                           # (bpg*N, C) f32 tokens
    w1 = slab_ref[0:c, :]
    wfc = slab_ref[c:3 * c, :]
    wo1 = slab_ref[3 * c:4 * c, :]
    wi2 = slab_ref[4 * c:5 * c, :]
    wo2 = slab_ref[5 * c:6 * c, :]
    b1 = slab_ref[6 * c:6 * c + 1, :].astype(jnp.float32)
    bfc = slab_ref[6 * c + 1:6 * c + 2, :].astype(jnp.float32)
    bo1 = slab_ref[6 * c + 2:6 * c + 3, :].astype(jnp.float32)
    bi2 = slab_ref[6 * c + 3:6 * c + 4, :].astype(jnp.float32)
    bo2 = slab_ref[6 * c + 4:6 * c + 5, :].astype(jnp.float32)

    # ---- grapher branch: fused in_layer1 ------------------------------------
    y = jnp.dot(xf.astype(cdt), w1, preferred_element_type=jnp.float32) + b1

    # ---- graph construction (f32 so neighbor selection matches reference) ----
    # One Gram matmul per step; per-image similarity = diagonal (N, N) blocks.
    sim_all = jax.lax.dot_general(xf, xf, (((1,), (1,)), ((), ())),
                                  preferred_element_type=jnp.float32)  # (rows, rows)
    if bpg == 1:
        sim = sim_all                                                  # (N, N)
    else:
        sim = jnp.concatenate(
            [sim_all[bi * n:(bi + 1) * n, bi * n:(bi + 1) * n] for bi in range(bpg)],
            axis=0)                                                    # (bpg*N, N)

    # Parallel rank count (no K-deep serial chain):
    #   cnt[i, j] = #{m : sim[i, m] > sim[i, j]};  mask = cnt < K (tie-inclusive).
    # TODO(synk): exact ties at the K-th similarity admit >K neighbors, unlike
    # torch.topk; identical whenever similarity values are distinct.
    # (A pltpu.roll-based rank count (XLU slot) was considered; the 16-wide lane
    #  extent makes the rotate lowering the riskier choice and this stage is tiny,
    #  so the lane column-broadcast compare is kept.)
    cnt = jnp.zeros((rows, n), jnp.float32)
    for m in range(n):                          # static unroll, VPU only
        cnt = cnt + (sim[:, m:m + 1] > sim).astype(jnp.float32)
    mask = cnt < jnp.float32(k)                 # (bpg*N, N)

    # ---- neighbor aggregation: running masked max (no (N, N, C) intermediate) -
    neg_inf = jnp.float32(-jnp.inf)             # K >= 1 keeps >=1 finite entry/row
    agg_parts = []
    for bi in range(bpg):                       # static unroll over images in step
        yb = y[bi * n:(bi + 1) * n, :]          # (N, C)
        mb = mask[bi * n:(bi + 1) * n, :]       # (N, N)
        acc = jnp.full((n, c), neg_inf, jnp.float32)
        for j in range(n):                      # static unroll, VPU only
            acc = jnp.maximum(
                acc, jnp.where(mb[:, j:j + 1], yb[j:j + 1, :], neg_inf))
        agg_parts.append(acc - yb)
    agg = agg_parts[0] if bpg == 1 else jnp.concatenate(agg_parts, axis=0)

    # ---- multi_head_fc: one matmul on the lane-concatenated [y | agg] tile ----
    cat = jnp.concatenate([y, agg], axis=-1)    # (bpg*N, 2C)
    h = jnp.dot(cat.astype(cdt), wfc, preferred_element_type=jnp.float32) + bfc

    x1 = (jnp.dot(_gelu(h).astype(cdt), wo1, preferred_element_type=jnp.float32)
          + bo1 + xf)                           # fused out_layer1 + shortcut

    # ---- FFN branch: fused in_layer2 -> GELU -> fused out_layer2 + shortcut ---
    g2 = _gelu(jnp.dot(x1.astype(cdt), wi2, preferred_element_type=jnp.float32) + bi2)
    x2 = (jnp.dot(g2.astype(cdt), wo2, preferred_element_type=jnp.float32)
          + bo2 + x1)

    # NOTE: C=32 lane width -> masked vst; a lane-dense (8,128) repack (v5e item)
    # was considered but the in-kernel relayout cost ~= the saving at this size.
    out_ref[...] = x2


# --------------------------- weight fusion / packing ---------------------------
def _fuse_two_layer(wa, ba, wb, bb):
    # (z @ Wa + ba) @ Wb + bb == z @ (Wa @ Wb) + (ba @ Wb + bb)  (no inner act)
    return wa @ wb, ba @ wb + bb


def prepare_kernel_slab(p, mxu_dtype=MXU_DTYPE):
    """Host-side, ONCE per model: fold the module's 19 tensors into one slab."""
    c = p["w1a"].shape[0]
    w1, b1 = _fuse_two_layer(p["w1a"], p["b1a"], p["w1b"], p["b1b"])
    wo1, bo1 = _fuse_two_layer(p["wo1a"], p["bo1a"], p["wo1b"], p["bo1b"])
    wi2, bi2 = _fuse_two_layer(p["wi2a"], p["bi2a"], p["wi2b"], p["bi2b"])
    wo2, bo2 = _fuse_two_layer(p["wo2a"], p["bo2a"], p["wo2b"], p["bo2b"])
    # Conv1d(2C->C, k=1) over interleaved [y_c, agg_c] channels == [y | agg] @ Wcat.
    wcat = jnp.concatenate([p["wfc"][:, 0::2].T, p["wfc"][:, 1::2].T], axis=0)   # (2C, C)
    w_rows = jnp.concatenate([w1, wcat, wo1, wi2, wo2], axis=0)                  # (6C, C)
    b_rows = jnp.concatenate([b1, p["bfc"], bo1, bi2, bo2], axis=0)              # (5, C)
    slab = jnp.zeros((6 * c + 8, c), jnp.float32)           # sublane-pad to x8 rows
    slab = slab.at[:6 * c, :].set(w_rows).at[6 * c:6 * c + 5, :].set(b_rows)
    return slab.astype(mxu_dtype)


# ---------------------------------- wrapper ----------------------------------
def vig_block_pallas(x, slab, *, k=K, images_per_step=1):
    """ViGBlock forward. `slab` comes from prepare_kernel_slab (precomputed once)."""
    b, n, c = x.shape
    assert b % images_per_step == 0, "batch must be divisible by images_per_step"
    steps = b // images_per_step
    rows = images_per_step * n                 # tokens handled per grid step
    xf = x.reshape(b * n, c)                   # free XLA reshape outside the kernel

    out = pl.pallas_call(
        functools.partial(vig_block_kernel, k, n),
        out_shape=jax.ShapeDtypeStruct((b * n, c), jnp.float32),
        grid=(steps,),
        in_specs=[
            # Constant index_map -> slab DMA'd once, VMEM-resident for all steps.
            pl.BlockSpec(slab.shape, lambda i: (0, 0)),
            # Token tiles stream and double-buffer across the grid.
            pl.BlockSpec((rows, c), lambda i: (i, 0)),
        ],
        out_specs=pl.BlockSpec((rows, c), lambda i: (i, 0)),
        # Independent images -> "parallel": sharded across v7x's 2 TensorCores,
        # plain pipelined loop on v5e/v6e.  Footprint (slab + 2x-buffered x/out)
        # is << 1 MiB, far under the default scoped VMEM on every generation,
        # so no vmem_limit_bytes override is needed.
        compiler_params=pltpu.CompilerParams(dimension_semantics=("parallel",)),
    )(slab, xf)
    return out.reshape(b, n, c)


# -------------------- pure-JAX reference (torch semantics) --------------------
def vig_block_ref(x, p):
    b, n, c = x.shape
    sim = jnp.einsum("bnc,bmc->bnm", x, x)
    _, idx = jax.lax.top_k(sim, K)                                   # (B, N, K)

    def tl(z, wa, ba, wb, bb):
        return (z @ wa + ba) @ wb + bb

    y = tl(x.reshape(b * n, c), p["w1a"], p["b1a"], p["w1b"], p["b1b"]).reshape(b, n, c)
    neib = jax.vmap(lambda yb, ib: yb[ib])(y, idx)                   # (B, N, K, C)
    agg = jnp.max(neib - y[:, :, None, :], axis=2)                   # (B, N, C)

    stacked = jnp.stack([y, agg], axis=-1).reshape(b * n, 2 * c)     # interleaved
    h = (stacked @ p["wfc"].T + p["bfc"]).reshape(b, n, c)           # Conv1d k=1

    g = jax.nn.gelu(h, approximate=False)
    x1 = tl(g.reshape(b * n, c), p["wo1a"], p["bo1a"], p["wo1b"], p["bo1b"]
            ).reshape(b, n, c) + x
    g2 = jax.nn.gelu(
        tl(x1.reshape(b * n, c), p["wi2a"], p["bi2a"], p["wi2b"], p["bi2b"]),
        approximate=False)
    x2 = tl(g2, p["wo2a"], p["bo2a"], p["wo2b"], p["bo2b"]).reshape(b, n, c) + x1
    return x2


def make_params(key):
    ks = jax.random.split(key, 24)
    it = iter(ks)

    def lin(fin, fout):
        w = jax.random.normal(next(it), (fin, fout), jnp.float32) / np.sqrt(fin)
        bias = 0.02 * jax.random.normal(next(it), (1, fout), jnp.float32)
        return w, bias

    p = {}
    p["w1a"], p["b1a"] = lin(C, C)          # in_layer1 fc1
    p["w1b"], p["b1b"] = lin(C, C)          # in_layer1 fc2
    p["wo1a"], p["bo1a"] = lin(C, C)        # out_layer1 fc1
    p["wo1b"], p["bo1b"] = lin(C, C)        # out_layer1 fc2
    p["wi2a"], p["bi2a"] = lin(C, HID2)     # in_layer2 fc1
    p["wi2b"], p["bi2b"] = lin(HID2, C)     # in_layer2 fc2
    p["wo2a"], p["bo2a"] = lin(C, HID2)     # out_layer2 fc1
    p["wo2b"], p["bo2b"] = lin(HID2, C)     # out_layer2 fc2
    # multi_head_fc: Conv1d(2C -> C, kernel 1, groups=1): weight (C, 2C), bias (C,)
    p["wfc"] = jax.random.normal(next(it), (C, 2 * C), jnp.float32) / np.sqrt(2 * C)
    p["bfc"] = 0.02 * jax.random.normal(next(it), (1, C), jnp.float32)
    return p


if __name__ == "__main__":
    key = jax.random.PRNGKey(0)
    kx, kp, kx2 = jax.random.split(key, 3)
    params = make_params(kp)
    slab = prepare_kernel_slab(params)      # hoisted: fused + packed once, reused

    # Primary check: module-sized input (B=2, N=16, C=32), one image per grid step.
    x = jax.random.normal(kx, (B, N, C), jnp.float32)
    out = jax.block_until_ready(vig_block_pallas(x, slab, k=K, images_per_step=1))
    ref = jax.block_until_ready(vig_block_ref(x, params))
    assert out.shape == (B, N, C)
    tol = 2e-3 if (MXU_DTYPE == jnp.float32 and not GELU_APPROXIMATE) else 3e-2
    np.testing.assert_allclose(np.asarray(out), np.asarray(ref), rtol=tol, atol=tol)

    # Amortized path (review item 1): several images per call, two per grid step.
    x4 = jax.random.normal(kx2, (4, N, C), jnp.float32)
    out4 = jax.block_until_ready(vig_block_pallas(x4, slab, k=K, images_per_step=2))
    ref4 = jax.block_until_ready(vig_block_ref(x4, params))
    np.testing.assert_allclose(np.asarray(out4), np.asarray(ref4), rtol=tol, atol=tol)

    print("KERNEL_OK")
</pallas_src>

<mosaic_0001>
module attributes {stable_mosaic.version = 11 : i64} {
  func.func @vig_block_kernel(%arg0: i32, %arg1: memref<200x32xf32, #tpu.memory_space<vmem>>, %arg2: memref<16x32xf32, #tpu.memory_space<vmem>>, %arg3: memref<16x32xf32, #tpu.memory_space<vmem>>) attributes {dimension_semantics = [#tpu.dimension_semantics<parallel>], iteration_bounds = array<i64: 2>, scalar_prefetch = 0 : i64, scratch_operands = 0 : i64, tpu.core_type = #tpu.core_type<tc>, window_params = [{pipeline_mode = #tpu.pipeline_mode<synchronous>, transform_indices = @transform_0, window_bounds = array<i64: 200, 32>}, {transform_indices = @transform_1, window_bounds = array<i64: 16, 32>}, {transform_indices = @transform_2, window_bounds = array<i64: 16, 32>}]} {
    %c0 = arith.constant 0 : index
    %c0_0 = arith.constant 0 : index
    %0 = vector.load %arg2[%c0, %c0_0] : memref<16x32xf32, #tpu.memory_space<vmem>>, vector<16x32xf32>
    %c0_1 = arith.constant 0 : index
    %c0_2 = arith.constant 0 : index
    %1 = vector.load %arg1[%c0_1, %c0_2] : memref<200x32xf32, #tpu.memory_space<vmem>>, vector<32x32xf32>
    %c32 = arith.constant 32 : index
    %c0_3 = arith.constant 0 : index
    %2 = vector.load %arg1[%c32, %c0_3] : memref<200x32xf32, #tpu.memory_space<vmem>>, vector<64x32xf32>
    %c96 = arith.constant 96 : index
    %c0_4 = arith.constant 0 : index
    %3 = vector.load %arg1[%c96, %c0_4] : memref<200x32xf32, #tpu.memory_space<vmem>>, vector<32x32xf32>
    %c128 = arith.constant 128 : index
    %c0_5 = arith.constant 0 : index
    %4 = vector.load %arg1[%c128, %c0_5] : memref<200x32xf32, #tpu.memory_space<vmem>>, vector<32x32xf32>
    %c160 = arith.constant 160 : index
    %c0_6 = arith.constant 0 : index
    %5 = vector.load %arg1[%c160, %c0_6] : memref<200x32xf32, #tpu.memory_space<vmem>>, vector<32x32xf32>
    %c192 = arith.constant 192 : index
    %c0_7 = arith.constant 0 : index
    %6 = vector.load %arg1[%c192, %c0_7] : memref<200x32xf32, #tpu.memory_space<vmem>>, vector<1x32xf32>
    %c193 = arith.constant 193 : index
    %c0_8 = arith.constant 0 : index
    %7 = vector.load %arg1[%c193, %c0_8] : memref<200x32xf32, #tpu.memory_space<vmem>>, vector<1x32xf32>
    %c194 = arith.constant 194 : index
    %c0_9 = arith.constant 0 : index
    %8 = vector.load %arg1[%c194, %c0_9] : memref<200x32xf32, #tpu.memory_space<vmem>>, vector<1x32xf32>
    %c195 = arith.constant 195 : index
    %c0_10 = arith.constant 0 : index
    %9 = vector.load %arg1[%c195, %c0_10] : memref<200x32xf32, #tpu.memory_space<vmem>>, vector<1x32xf32>
    %c196 = arith.constant 196 : index
    %c0_11 = arith.constant 0 : index
    %10 = vector.load %arg1[%c196, %c0_11] : memref<200x32xf32, #tpu.memory_space<vmem>>, vector<1x32xf32>
    %cst = arith.constant dense<0.000000e+00> : vector<16x32xf32>
    %11 = tpu.matmul %0, %1, %cst {dimension_numbers = #tpu.dot_dimension_numbers<[1], [0], [0], [1], [0, 0, 1, 1], [], []>} : vector<16x32xf32>, vector<32x32xf32>, vector<16x32xf32> -> vector<16x32xf32>
    %12 = vector.broadcast %6 : vector<1x32xf32> to vector<16x32xf32>
    %13 = arith.addf %11, %12 : vector<16x32xf32>
    %cst_12 = arith.constant dense<0.000000e+00> : vector<16x16xf32>
    %14 = tpu.matmul %0, %0, %cst_12 {dimension_numbers = #tpu.dot_dimension_numbers<[1], [1], [0], [0], [0, 0, 1, 0], [], []>} : vector<16x32xf32>, vector<16x32xf32>, vector<16x16xf32> -> vector<16x16xf32>
    %cst_13 = arith.constant 0.000000e+00 : f32
    %15 = vector.broadcast %cst_13 : f32 to vector<16x16xf32>
    %16 = vector.extract_strided_slice %14 {offsets = [0, 0], sizes = [16, 1], strides = [1, 1]} : vector<16x16xf32> to vector<16x1xf32>
    %17 = vector.broadcast %16 : vector<16x1xf32> to vector<16x16xf32>
    %18 = arith.cmpf ogt, %17, %14 : vector<16x16xf32>
    %19 = arith.extui %18 : vector<16x16xi1> to vector<16x16xi32>
    %20 = arith.sitofp %19 : vector<16x16xi32> to vector<16x16xf32>
    %21 = arith.addf %15, %20 : vector<16x16xf32>
    %22 = vector.extract_strided_slice %14 {offsets = [0, 1], sizes = [16, 1], strides = [1, 1]} : vector<16x16xf32> to vector<16x1xf32>
    %23 = vector.broadcast %22 : vector<16x1xf32> to vector<16x16xf32>
    %24 = arith.cmpf ogt, %23, %14 : vector<16x16xf32>
    %25 = arith.extui %24 : vector<16x16xi1> to vector<16x16xi32>
    %26 = arith.sitofp %25 : vector<16x16xi32> to vector<16x16xf32>
    %27 = arith.addf %21, %26 : vector<16x16xf32>
    %28 = vector.extract_strided_slice %14 {offsets = [0, 2], sizes = [16, 1], strides = [1, 1]} : vector<16x16xf32> to vector<16x1xf32>
    %29 = vector.broadcast %28 : vector<16x1xf32> to vector<16x16xf32>
    %30 = arith.cmpf ogt, %29, %14 : vector<16x16xf32>
    %31 = arith.extui %30 : vector<16x16xi1> to vector<16x16xi32>
    %32 = arith.sitofp %31 : vector<16x16xi32> to vector<16x16xf32>
    %33 = arith.addf %27, %32 : vector<16x16xf32>
    %34 = vector.extract_strided_slice %14 {offsets = [0, 3], sizes = [16, 1], strides = [1, 1]} : vector<16x16xf32> to vector<16x1xf32>
    %35 = vector.broadcast %34 : vector<16x1xf32> to vector<16x16xf32>
    %36 = arith.cmpf ogt, %35, %14 : vector<16x16xf32>
    %37 = arith.extui %36 : vector<16x16xi1> to vector<16x16xi32>
    %38 = arith.sitofp %37 : vector<16x16xi32> to vector<16x16xf32>
    %39 = arith.addf %33, %38 : vector<16x16xf32>
    %40 = vector.extract_strided_slice %14 {offsets = [0, 4], sizes = [16, 1], strides = [1, 1]} : vector<16x16xf32> to vector<16x1xf32>
    %41 = vector.broadcast %40 : vector<16x1xf32> to vector<16x16xf32>
    %42 = arith.cmpf ogt, %41, %14 : vector<16x16xf32>
    %43 = arith.extui %42 : vector<16x16xi1> to vector<16x16xi32>
    %44 = arith.sitofp %43 : vector<16x16xi32> to vector<16x16xf32>
    %45 = arith.addf %39, %44 : vector<16x16xf32>
    %46 = vector.extract_strided_slice %14 {offsets = [0, 5], sizes = [16, 1], strides = [1, 1]} : vector<16x16xf32> to vector<16x1xf32>
    %47 = vector.broadcast %46 : vector<16x1xf32> to vector<16x16xf32>
    %48 = arith.cmpf ogt, %47, %14 : vector<16x16xf32>
    %49 = arith.extui %48 : vector<16x16xi1> to vector<16x16xi32>
    %50 = arith.sitofp %49 : vector<16x16xi32> to vector<16x16xf32>
    %51 = arith.addf %45, %50 : vector<16x16xf32>
    %52 = vector.extract_strided_slice %14 {offsets = [0, 6], sizes = [16, 1], strides = [1, 1]} : vector<16x16xf32> to vector<16x1xf32>
    %53 = vector.broadcast %52 : vector<16x1xf32> to vector<16x16xf32>
    %54 = arith.cmpf ogt, %53, %14 : vector<16x16xf32>
    %55 = arith.extui %54 : vector<16x16xi1> to vector<16x16xi32>
    %56 = arith.sitofp %55 : vector<16x16xi32> to vector<16x16xf32>
    %57 = arith.addf %51, %56 : vector<16x16xf32>
    %58 = vector.extract_strided_slice %14 {offsets = [0, 7], sizes = [16, 1], strides = [1, 1]} : vector<16x16xf32> to vector<16x1xf32>
    %59 = vector.broadcast %58 : vector<16x1xf32> to vector<16x16xf32>
    %60 = arith.cmpf ogt, %59, %14 : vector<16x16xf32>
    %61 = arith.extui %60 : vector<16x16xi1> to vector<16x16xi32>
    %62 = arith.sitofp %61 : vector<16x16xi32> to vector<16x16xf32>
    %63 = arith.addf %57, %62 : vector<16x16xf32>
    %64 = vector.extract_strided_slice %14 {offsets = [0, 8], sizes = [16, 1], strides = [1, 1]} : vector<16x16xf32> to vector<16x1xf32>
    %65 = vector.broadcast %64 : vector<16x1xf32> to vector<16x16xf32>
    %66 = arith.cmpf ogt, %65, %14 : vector<16x16xf32>
    %67 = arith.extui %66 : vector<16x16xi1> to vector<16x16xi32>
    %68 = arith.sitofp %67 : vector<16x16xi32> to vector<16x16xf32>
    %69 = arith.addf %63, %68 : vector<16x16xf32>
    %70 = vector.extract_strided_slice %14 {offsets = [0, 9], sizes = [16, 1], strides = [1, 1]} : vector<16x16xf32> to vector<16x1xf32>
    %71 = vector.broadcast %70 : vector<16x1xf32> to vector<16x16xf32>
    %72 = arith.cmpf ogt, %71, %14 : vector<16x16xf32>
    %73 = arith.extui %72 : vector<16x16xi1> to vector<16x16xi32>
    %74 = arith.sitofp %73 : vector<16x16xi32> to vector<16x16xf32>
    %75 = arith.addf %69, %74 : vector<16x16xf32>
    %76 = vector.extract_strided_slice %14 {offsets = [0, 10], sizes = [16, 1], strides = [1, 1]} : vector<16x16xf32> to vector<16x1xf32>
    %77 = vector.broadcast %76 : vector<16x1xf32> to vector<16x16xf32>
    %78 = arith.cmpf ogt, %77, %14 : vector<16x16xf32>
    %79 = arith.extui %78 : vector<16x16xi1> to vector<16x16xi32>
    %80 = arith.sitofp %79 : vector<16x16xi32> to vector<16x16xf32>
    %81 = arith.addf %75, %80 : vector<16x16xf32>
    %82 = vector.extract_strided_slice %14 {offsets = [0, 11], sizes = [16, 1], strides = [1, 1]} : vector<16x16xf32> to vector<16x1xf32>
    %83 = vector.broadcast %82 : vector<16x1xf32> to vector<16x16xf32>
    %84 = arith.cmpf ogt, %83, %14 : vector<16x16xf32>
    %85 = arith.extui %84 : vector<16x16xi1> to vector<16x16xi32>
    %86 = arith.sitofp %85 : vector<16x16xi32> to vector<16x16xf32>
    %87 = arith.addf %81, %86 : vector<16x16xf32>
    %88 = vector.extract_strided_slice %14 {offsets = [0, 12], sizes = [16, 1], strides = [1, 1]} : vector<16x16xf32> to vector<16x1xf32>
    %89 = vector.broadcast %88 : vector<16x1xf32> to vector<16x16xf32>
    %90 = arith.cmpf ogt, %89, %14 : vector<16x16xf32>
    %91 = arith.extui %90 : vector<16x16xi1> to vector<16x16xi32>
    %92 = arith.sitofp %91 : vector<16x16xi32> to vector<16x16xf32>
    %93 = arith.addf %87, %92 : vector<16x16xf32>
    %94 = vector.extract_strided_slice %14 {offsets = [0, 13], sizes = [16, 1], strides = [1, 1]} : vector<16x16xf32> to vector<16x1xf32>
    %95 = vector.broadcast %94 : vector<16x1xf32> to vector<16x16xf32>
    %96 = arith.cmpf ogt, %95, %14 : vector<16x16xf32>
    %97 = arith.extui %96 : vector<16x16xi1> to vector<16x16xi32>
    %98 = arith.sitofp %97 : vector<16x16xi32> to vector<16x16xf32>
    %99 = arith.addf %93, %98 : vector<16x16xf32>
    %100 = vector.extract_strided_slice %14 {offsets = [0, 14], sizes = [16, 1], strides = [1, 1]} : vector<16x16xf32> to vector<16x1xf32>
    %101 = vector.broadcast %100 : vector<16x1xf32> to vector<16x16xf32>
    %102 = arith.cmpf ogt, %101, %14 : vector<16x16xf32>
    %103 = arith.extui %102 : vector<16x16xi1> to vector<16x16xi32>
    %104 = arith.sitofp %103 : vector<16x16xi32> to vector<16x16xf32>
    %105 = arith.addf %99, %104 : vector<16x16xf32>
    %106 = vector.extract_strided_slice %14 {offsets = [0, 15], sizes = [16, 1], strides = [1, 1]} : vector<16x16xf32> to vector<16x1xf32>
    %107 = vector.broadcast %106 : vector<16x1xf32> to vector<16x16xf32>
    %108 = arith.cmpf ogt, %107, %14 : vector<16x16xf32>
    %109 = arith.extui %108 : vector<16x16xi1> to vector<16x16xi32>
    %110 = arith.sitofp %109 : vector<16x16xi32> to vector<16x16xf32>
    %111 = arith.addf %105, %110 : vector<16x16xf32>
    %cst_14 = arith.constant 9.000000e+00 : f32
    %112 = vector.broadcast %cst_14 : f32 to vector<16x16xf32>
    %113 = arith.cmpf olt, %111, %112 : vector<16x16xf32>
    %cst_15 = arith.constant 0xFF800000 : f32
    %114 = vector.broadcast %cst_15 : f32 to vector<16x32xf32>
    %115 = vector.extract_strided_slice %113 {offsets = [0, 0], sizes = [16, 1], strides = [1, 1]} : vector<16x16xi1> to vector<16x1xi1>
    %116 = vector.extract_strided_slice %13 {offsets = [0, 0], sizes = [1, 32], strides = [1, 1]} : vector<16x32xf32> to vector<1x32xf32>
    %cst_16 = arith.constant 0xFF800000 : f32
    %117 = vector.shape_cast %115 : vector<16x1xi1> to vector<16x1xi1>
    %118 = vector.broadcast %117 : vector<16x1xi1> to vector<16x32xi1>
    %119 = vector.shape_cast %116 : vector<1x32xf32> to vector<1x32xf32>
    %120 = vector.broadcast %119 : vector<1x32xf32> to vector<16x32xf32>
    %121 = vector.broadcast %cst_16 : f32 to vector<16x32xf32>
    %122 = arith.select %118, %120, %121 : vector<16x32xi1>, vector<16x32xf32>
    %123 = arith.maximumf %114, %122 : vector<16x32xf32>
    %124 = vector.extract_strided_slice %113 {offsets = [0, 1], sizes = [16, 1], strides = [1, 1]} : vector<16x16xi1> to vector<16x1xi1>
    %125 = vector.extract_strided_slice %13 {offsets = [1, 0], sizes = [1, 32], strides = [1, 1]} : vector<16x32xf32> to vector<1x32xf32>
    %cst_17 = arith.constant 0xFF800000 : f32
    %126 = vector.shape_cast %124 : vector<16x1xi1> to vector<16x1xi1>
    %127 = vector.broadcast %126 : vector<16x1xi1> to vector<16x32xi1>
    %128 = vector.shape_cast %125 : vector<1x32xf32> to vector<1x32xf32>
    %129 = vector.broadcast %128 : vector<1x32xf32> to vector<16x32xf32>
    %130 = vector.broadcast %cst_17 : f32 to vector<16x32xf32>
    %131 = arith.select %127, %129, %130 : vector<16x32xi1>, vector<16x32xf32>
    %132 = arith.maximumf %123, %131 : vector<16x32xf32>
    %133 = vector.extract_strided_slice %113 {offsets = [0, 2], sizes = [16, 1], strides = [1, 1]} : vector<16x16xi1> to vector<16x1xi1>
    %134 = vector.extract_strided_slice %13 {offsets = [2, 0], sizes = [1, 32], strides = [1, 1]} : vector<16x32xf32> to vector<1x32xf32>
    %cst_18 = arith.constant 0xFF800000 : f32
    %135 = vector.shape_cast %133 : vector<16x1xi1> to vector<16x1xi1>
    %136 = vector.broadcast %135 : vector<16x1xi1> to vector<16x32xi1>
    %137 = vector.shape_cast %134 : vector<1x32xf32> to vector<1x32xf32>
    %138 = vector.broadcast %137 : vector<1x32xf32> to vector<16x32xf32>
    %139 = vector.broadcast %cst_18 : f32 to vector<16x32xf32>
    %140 = arith.select %136, %138, %139 : vector<16x32xi1>, vector<16x32xf32>
    %141 = arith.maximumf %132, %140 : vector<16x32xf32>
    %142 = vector.extract_strided_slice %113 {offsets = [0, 3], sizes = [16, 1], strides = [1, 1]} : vector<16x16xi1> to vector<16x1xi1>
    %143 = vector.extract_strided_slice %13 {offsets = [3, 0], sizes = [1, 32], strides = [1, 1]} : vector<16x32xf32> to vector<1x32xf32>
    %cst_19 = arith.constant 0xFF800000 : f32
    %144 = vector.shape_cast %142 : vector<16x1xi1> to vector<16x1xi1>
    %145 = vector.broadcast %144 : vector<16x1xi1> to vector<16x32xi1>
    %146 = vector.shape_cast %143 : vector<1x32xf32> to vector<1x32xf32>
    %147 = vector.broadcast %146 : vector<1x32xf32> to vector<16x32xf32>
    %148 = vector.broadcast %cst_19 : f32 to vector<16x32xf32>
    %149 = arith.select %145, %147, %148 : vector<16x32xi1>, vector<16x32xf32>
    %150 = arith.maximumf %141, %149 : vector<16x32xf32>
    %151 = vector.extract_strided_slice %113 {offsets = [0, 4], sizes = [16, 1], strides = [1, 1]} : vector<16x16xi1> to vector<16x1xi1>
    %152 = vector.extract_strided_slice %13 {offsets = [4, 0], sizes = [1, 32], strides = [1, 1]} : vector<16x32xf32> to vector<1x32xf32>
    %cst_20 = arith.constant 0xFF800000 : f32
    %153 = vector.shape_cast %151 : vector<16x1xi1> to vector<16x1xi1>
    %154 = vector.broadcast %153 : vector<16x1xi1> to vector<16x32xi1>
    %155 = vector.shape_cast %152 : vector<1x32xf32> to vector<1x32xf32>
    %156 = vector.broadcast %155 : vector<1x32xf32> to vector<16x32xf32>
    %157 = vector.broadcast %cst_20 : f32 to vector<16x32xf32>
    %158 = arith.select %154, %156, %157 : vector<16x32xi1>, vector<16x32xf32>
    %159 = arith.maximumf %150, %158 : vector<16x32xf32>
    %160 = vector.extract_strided_slice %113 {offsets = [0, 5], sizes = [16, 1], strides = [1, 1]} : vector<16x16xi1> to vector<16x1xi1>
    %161 = vector.extract_strided_slice %13 {offsets = [5, 0], sizes = [1, 32], strides = [1, 1]} : vector<16x32xf32> to vector<1x32xf32>
    %cst_21 = arith.constant 0xFF800000 : f32
    %162 = vector.shape_cast %160 : vector<16x1xi1> to vector<16x1xi1>
    %163 = vector.broadcast %162 : vector<16x1xi1> to vector<16x32xi1>
    %164 = vector.shape_cast %161 : vector<1x32xf32> to vector<1x32xf32>
    %165 = vector.broadcast %164 : vector<1x32xf32> to vector<16x32xf32>
    %166 = vector.broadcast %cst_21 : f32 to vector<16x32xf32>
    %167 = arith.select %163, %165, %166 : vector<16x32xi1>, vector<16x32xf32>
    %168 = arith.maximumf %159, %167 : vector<16x32xf32>
    %169 = vector.extract_strided_slice %113 {offsets = [0, 6], sizes = [16, 1], strides = [1, 1]} : vector<16x16xi1> to vector<16x1xi1>
    %170 = vector.extract_strided_slice %13 {offsets = [6, 0], sizes = [1, 32], strides = [1, 1]} : vector<16x32xf32> to vector<1x32xf32>
    %cst_22 = arith.constant 0xFF800000 : f32
    %171 = vector.shape_cast %169 : vector<16x1xi1> to vector<16x1xi1>
    %172 = vector.broadcast %171 : vector<16x1xi1> to vector<16x32xi1>
    %173 = vector.shape_cast %170 : vector<1x32xf32> to vector<1x32xf32>
    %174 = vector.broadcast %173 : vector<1x32xf32> to vector<16x32xf32>
    %175 = vector.broadcast %cst_22 : f32 to vector<16x32xf32>
    %176 = arith.select %172, %174, %175 : vector<16x32xi1>, vector<16x32xf32>
    %177 = arith.maximumf %168, %176 : vector<16x32xf32>
    %178 = vector.extract_strided_slice %113 {offsets = [0, 7], sizes = [16, 1], strides = [1, 1]} : vector<16x16xi1> to vector<16x1xi1>
    %179 = vector.extract_strided_slice %13 {offsets = [7, 0], sizes = [1, 32], strides = [1, 1]} : vector<16x32xf32> to vector<1x32xf32>
    %cst_23 = arith.constant 0xFF800000 : f32
    %180 = vector.shape_cast %178 : vector<16x1xi1> to vector<16x1xi1>
    %181 = vector.broadcast %180 : vector<16x1xi1> to vector<16x32xi1>
    %182 = vector.shape_cast %179 : vector<1x32xf32> to vector<1x32xf32>
    %183 = vector.broadcast %182 : vector<1x32xf32> to vector<16x32xf32>
    %184 = vector.broadcast %cst_23 : f32 to vector<16x32xf32>
    %185 = arith.select %181, %183, %184 : vector<16x32xi1>, vector<16x32xf32>
    %186 = arith.maximumf %177, %185 : vector<16x32xf32>
    %187 = vector.extract_strided_slice %113 {offsets = [0, 8], sizes = [16, 1], strides = [1, 1]} : vector<16x16xi1> to vector<16x1xi1>
    %188 = vector.extract_strided_slice %13 {offsets = [8, 0], sizes = [1, 32], strides = [1, 1]} : vector<16x32xf32> to vector<1x32xf32>
    %cst_24 = arith.constant 0xFF800000 : f32
    %189 = vector.shape_cast %187 : vector<16x1xi1> to vector<16x1xi1>
    %190 = vector.broadcast %189 : vector<16x1xi1> to vector<16x32xi1>
    %191 = vector.shape_cast %188 : vector<1x32xf32> to vector<1x32xf32>
    %192 = vector.broadcast %191 : vector<1x32xf32> to vector<16x32xf32>
    %193 = vector.broadcast %cst_24 : f32 to vector<16x32xf32>
    %194 = arith.select %190, %192, %193 : vector<16x32xi1>, vector<16x32xf32>
    %195 = arith.maximumf %186, %194 : vector<16x32xf32>
    %196 = vector.extract_strided_slice %113 {offsets = [0, 9], sizes = [16, 1], strides = [1, 1]} : vector<16x16xi1> to vector<16x1xi1>
    %197 = vector.extract_strided_slice %13 {offsets = [9, 0], sizes = [1, 32], strides = [1, 1]} : vector<16x32xf32> to vector<1x32xf32>
    %cst_25 = arith.constant 0xFF800000 : f32
    %198 = vector.shape_cast %196 : vector<16x1xi1> to vector<16x1xi1>
    %199 = vector.broadcast %198 : vector<16x1xi1> to vector<16x32xi1>
    %200 = vector.shape_cast %197 : vector<1x32xf32> to vector<1x32xf32>
    %201 = vector.broadcast %200 : vector<1x32xf32> to vector<16x32xf32>
    %202 = vector.broadcast %cst_25 : f32 to vector<16x32xf32>
    %203 = arith.select %199, %201, %202 : vector<16x32xi1>, vector<16x32xf32>
    %204 = arith.maximumf %195, %203 : vector<16x32xf32>
    %205 = vector.extract_strided_slice %113 {offsets = [0, 10], sizes = [16, 1], strides = [1, 1]} : vector<16x16xi1> to vector<16x1xi1>
    %206 = vector.extract_strided_slice %13 {offsets = [10, 0], sizes = [1, 32], strides = [1, 1]} : vector<16x32xf32> to vector<1x32xf32>
    %cst_26 = arith.constant 0xFF800000 : f32
    %207 = vector.shape_cast %205 : vector<16x1xi1> to vector<16x1xi1>
    %208 = vector.broadcast %207 : vector<16x1xi1> to vector<16x32xi1>
    %209 = vector.shape_cast %206 : vector<1x32xf32> to vector<1x32xf32>
    %210 = vector.broadcast %209 : vector<1x32xf32> to vector<16x32xf32>
    %211 = vector.broadcast %cst_26 : f32 to vector<16x32xf32>
    %212 = arith.select %208, %210, %211 : vector<16x32xi1>, vector<16x32xf32>
    %213 = arith.maximumf %204, %212 : vector<16x32xf32>
    %214 = vector.extract_strided_slice %113 {offsets = [0, 11], sizes = [16, 1], strides = [1, 1]} : vector<16x16xi1> to vector<16x1xi1>
    %215 = vector.extract_strided_slice %13 {offsets = [11, 0], sizes = [1, 32], strides = [1, 1]} : vector<16x32xf32> to vector<1x32xf32>
    %cst_27 = arith.constant 0xFF800000 : f32
    %216 = vector.shape_cast %214 : vector<16x1xi1> to vector<16x1xi1>
    %217 = vector.broadcast %216 : vector<16x1xi1> to vector<16x32xi1>
    %218 = vector.shape_cast %215 : vector<1x32xf32> to vector<1x32xf32>
    %219 = vector.broadcast %218 : vector<1x32xf32> to vector<16x32xf32>
    %220 = vector.broadcast %cst_27 : f32 to vector<16x32xf32>
    %221 = arith.select %217, %219, %220 : vector<16x32xi1>, vector<16x32xf32>
    %222 = arith.maximumf %213, %221 : vector<16x32xf32>
    %223 = vector.extract_strided_slice %113 {offsets = [0, 12], sizes = [16, 1], strides = [1, 1]} : vector<16x16xi1> to vector<16x1xi1>
    %224 = vector.extract_strided_slice %13 {offsets = [12, 0], sizes = [1, 32], strides = [1, 1]} : vector<16x32xf32> to vector<1x32xf32>
    %cst_28 = arith.constant 0xFF800000 : f32
    %225 = vector.shape_cast %223 : vector<16x1xi1> to vector<16x1xi1>
    %226 = vector.broadcast %225 : vector<16x1xi1> to vector<16x32xi1>
    %227 = vector.shape_cast %224 : vector<1x32xf32> to vector<1x32xf32>
    %228 = vector.broadcast %227 : vector<1x32xf32> to vector<16x32xf32>
    %229 = vector.broadcast %cst_28 : f32 to vector<16x32xf32>
    %230 = arith.select %226, %228, %229 : vector<16x32xi1>, vector<16x32xf32>
    %231 = arith.maximumf %222, %230 : vector<16x32xf32>
    %232 = vector.extract_strided_slice %113 {offsets = [0, 13], sizes = [16, 1], strides = [1, 1]} : vector<16x16xi1> to vector<16x1xi1>
    %233 = vector.extract_strided_slice %13 {offsets = [13, 0], sizes = [1, 32], strides = [1, 1]} : vector<16x32xf32> to vector<1x32xf32>
    %cst_29 = arith.constant 0xFF800000 : f32
    %234 = vector.shape_cast %232 : vector<16x1xi1> to vector<16x1xi1>
    %235 = vector.broadcast %234 : vector<16x1xi1> to vector<16x32xi1>
    %236 = vector.shape_cast %233 : vector<1x32xf32> to vector<1x32xf32>
    %237 = vector.broadcast %236 : vector<1x32xf32> to vector<16x32xf32>
    %238 = vector.broadcast %cst_29 : f32 to vector<16x32xf32>
    %239 = arith.select %235, %237, %238 : vector<16x32xi1>, vector<16x32xf32>
    %240 = arith.maximumf %231, %239 : vector<16x32xf32>
    %241 = vector.extract_strided_slice %113 {offsets = [0, 14], sizes = [16, 1], strides = [1, 1]} : vector<16x16xi1> to vector<16x1xi1>
    %242 = vector.extract_strided_slice %13 {offsets = [14, 0], sizes = [1, 32], strides = [1, 1]} : vector<16x32xf32> to vector<1x32xf32>
    %cst_30 = arith.constant 0xFF800000 : f32
    %243 = vector.shape_cast %241 : vector<16x1xi1> to vector<16x1xi1>
    %244 = vector.broadcast %243 : vector<16x1xi1> to vector<16x32xi1>
    %245 = vector.shape_cast %242 : vector<1x32xf32> to vector<1x32xf32>
    %246 = vector.broadcast %245 : vector<1x32xf32> to vector<16x32xf32>
    %247 = vector.broadcast %cst_30 : f32 to vector<16x32xf32>
    %248 = arith.select %244, %246, %247 : vector<16x32xi1>, vector<16x32xf32>
    %249 = arith.maximumf %240, %248 : vector<16x32xf32>
    %250 = vector.extract_strided_slice %113 {offsets = [0, 15], sizes = [16, 1], strides = [1, 1]} : vector<16x16xi1> to vector<16x1xi1>
    %251 = vector.extract_strided_slice %13 {offsets = [15, 0], sizes = [1, 32], strides = [1, 1]} : vector<16x32xf32> to vector<1x32xf32>
    %cst_31 = arith.constant 0xFF800000 : f32
    %252 = vector.shape_cast %250 : vector<16x1xi1> to vector<16x1xi1>
    %253 = vector.broadcast %252 : vector<16x1xi1> to vector<16x32xi1>
    %254 = vector.shape_cast %251 : vector<1x32xf32> to vector<1x32xf32>
    %255 = vector.broadcast %254 : vector<1x32xf32> to vector<16x32xf32>
    %256 = vector.broadcast %cst_31 : f32 to vector<16x32xf32>
    %257 = arith.select %253, %255, %256 : vector<16x32xi1>, vector<16x32xf32>
    %258 = arith.maximumf %249, %257 : vector<16x32xf32>
    %259 = arith.subf %258, %13 : vector<16x32xf32>
    %260 = tpu.concatenate %13, %259 in 1 : vector<16x32xf32>, vector<16x32xf32> -> vector<16x64xf32>
    %cst_32 = arith.constant dense<0.000000e+00> : vector<16x32xf32>
    %261 = tpu.matmul %260, %2, %cst_32 {dimension_numbers = #tpu.dot_dimension_numbers<[1], [0], [0], [1], [0, 0, 1, 1], [], []>} : vector<16x64xf32>, vector<64x32xf32>, vector<16x32xf32> -> vector<16x32xf32>
    %262 = vector.broadcast %7 : vector<1x32xf32> to vector<16x32xf32>
    %263 = arith.addf %261, %262 : vector<16x32xf32>
    %cst_33 = arith.constant 5.000000e-01 : f32
    %264 = vector.broadcast %cst_33 : f32 to vector<16x32xf32>
    %265 = arith.mulf %264, %263 : vector<16x32xf32>
    %cst_34 = arith.constant 0.707106769 : f32
    %266 = vector.broadcast %cst_34 : f32 to vector<16x32xf32>
    %267 = arith.mulf %263, %266 : vector<16x32xf32>
    %268 = math.absf %267 : vector<16x32xf32>
    %cst_35 = arith.constant 0.327591091 : f32
    %269 = vector.broadcast %cst_35 : f32 to vector<16x32xf32>
    %270 = arith.mulf %269, %268 : vector<16x32xf32>
    %cst_36 = arith.constant 1.000000e+00 : f32
    %271 = vector.broadcast %cst_36 : f32 to vector<16x32xf32>
    %272 = arith.addf %271, %270 : vector<16x32xf32>
    %cst_37 = arith.constant 1.000000e+00 : f32
    %273 = vector.broadcast %cst_37 : f32 to vector<16x32xf32>
    %274 = arith.divf %273, %272 : vector<16x32xf32>
    %cst_38 = arith.constant 1.06140542 : f32
    %275 = vector.broadcast %cst_38 : f32 to vector<16x32xf32>
    %276 = arith.mulf %275, %274 : vector<16x32xf32>
    %cst_39 = arith.constant -1.45315206 : f32
    %277 = vector.broadcast %cst_39 : f32 to vector<16x32xf32>
    %278 = arith.addf %276, %277 : vector<16x32xf32>
    %279 = arith.mulf %278, %274 : vector<16x32xf32>
    %cst_40 = arith.constant 1.42141378 : f32
    %280 = vector.broadcast %cst_40 : f32 to vector<16x32xf32>
    %281 = arith.addf %279, %280 : vector<16x32xf32>
    %282 = arith.mulf %281, %274 : vector<16x32xf32>
    %cst_41 = arith.constant -0.284496725 : f32
    %283 = vector.broadcast %cst_41 : f32 to vector<16x32xf32>
    %284 = arith.addf %282, %283 : vector<16x32xf32>
    %285 = arith.mulf %284, %274 : vector<16x32xf32>
    %cst_42 = arith.constant 0.254829586 : f32
    %286 = vector.broadcast %cst_42 : f32 to vector<16x32xf32>
    %287 = arith.addf %285, %286 : vector<16x32xf32>
    %288 = arith.mulf %287, %274 : vector<16x32xf32>
    %cst_43 = arith.constant 0.000000e+00 : f32
    %289 = vector.broadcast %cst_43 : f32 to vector<16x32xf32>
    %290 = arith.subf %289, %268 : vector<16x32xf32>
    %291 = arith.mulf %290, %268 : vector<16x32xf32>
    %292 = math.exp %291 : vector<16x32xf32>
    %293 = arith.mulf %288, %292 : vector<16x32xf32>
    %cst_44 = arith.constant 1.000000e+00 : f32
    %294 = vector.broadcast %cst_44 : f32 to vector<16x32xf32>
    %295 = arith.subf %294, %293 : vector<16x32xf32>
    %cst_45 = arith.constant 0.000000e+00 : f32
    %296 = vector.broadcast %cst_45 : f32 to vector<16x32xf32>
    %297 = arith.cmpf oge, %267, %296 : vector<16x32xf32>
    %cst_46 = arith.constant 0.000000e+00 : f32
    %298 = vector.broadcast %cst_46 : f32 to vector<16x32xf32>
    %299 = arith.subf %298, %295 : vector<16x32xf32>
    %300 = arith.select %297, %295, %299 : vector<16x32xi1>, vector<16x32xf32>
    %cst_47 = arith.constant 1.000000e+00 : f32
    %301 = vector.broadcast %cst_47 : f32 to vector<16x32xf32>
    %302 = arith.addf %301, %300 : vector<16x32xf32>
    %303 = arith.mulf %265, %302 : vector<16x32xf32>
    %cst_48 = arith.constant dense<0.000000e+00> : vector<16x32xf32>
    %304 = tpu.matmul %303, %3, %cst_48 {dimension_numbers = #tpu.dot_dimension_numbers<[1], [0], [0], [1], [0, 0, 1, 1], [], []>} : vector<16x32xf32>, vector<32x32xf32>, vector<16x32xf32> -> vector<16x32xf32>
    %305 = vector.broadcast %8 : vector<1x32xf32> to vector<16x32xf32>
    %306 = arith.addf %304, %305 : vector<16x32xf32>
    %307 = arith.addf %306, %0 : vector<16x32xf32>
    %cst_49 = arith.constant dense<0.000000e+00> : vector<16x32xf32>
    %308 = tpu.matmul %307, %4, %cst_49 {dimension_numbers = #tpu.dot_dimension_numbers<[1], [0], [0], [1], [0, 0, 1, 1], [], []>} : vector<16x32xf32>, vector<32x32xf32>, vector<16x32xf32> -> vector<16x32xf32>
    %309 = vector.broadcast %9 : vector<1x32xf32> to vector<16x32xf32>
    %310 = arith.addf %308, %309 : vector<16x32xf32>
    %cst_50 = arith.constant 5.000000e-01 : f32
    %311 = vector.broadcast %cst_50 : f32 to vector<16x32xf32>
    %312 = arith.mulf %311, %310 : vector<16x32xf32>
    %cst_51 = arith.constant 0.707106769 : f32
    %313 = vector.broadcast %cst_51 : f32 to vector<16x32xf32>
    %314 = arith.mulf %310, %313 : vector<16x32xf32>
    %315 = math.absf %314 : vector<16x32xf32>
    %cst_52 = arith.constant 0.327591091 : f32
    %316 = vector.broadcast %cst_52 : f32 to vector<16x32xf32>
    %317 = arith.mulf %316, %315 : vector<16x32xf32>
    %cst_53 = arith.constant 1.000000e+00 : f32
    %318 = vector.broadcast %cst_53 : f32 to vector<16x32xf32>
    %319 = arith.addf %318, %317 : vector<16x32xf32>
    %cst_54 = arith.constant 1.000000e+00 : f32
    %320 = vector.broadcast %cst_54 : f32 to vector<16x32xf32>
    %321 = arith.divf %320, %319 : vector<16x32xf32>
    %cst_55 = arith.constant 1.06140542 : f32
    %322 = vector.broadcast %cst_55 : f32 to vector<16x32xf32>
    %323 = arith.mulf %322, %321 : vector<16x32xf32>
    %cst_56 = arith.constant -1.45315206 : f32
    %324 = vector.broadcast %cst_56 : f32 to vector<16x32xf32>
    %325 = arith.addf %323, %324 : vector<16x32xf32>
    %326 = arith.mulf %325, %321 : vector<16x32xf32>
    %cst_57 = arith.constant 1.42141378 : f32
    %327 = vector.broadcast %cst_57 : f32 to vector<16x32xf32>
    %328 = arith.addf %326, %327 : vector<16x32xf32>
    %329 = arith.mulf %328, %321 : vector<16x32xf32>
    %cst_58 = arith.constant -0.284496725 : f32
    %330 = vector.broadcast %cst_58 : f32 to vector<16x32xf32>
    %331 = arith.addf %329, %330 : vector<16x32xf32>
    %332 = arith.mulf %331, %321 : vector<16x32xf32>
    %cst_59 = arith.constant 0.254829586 : f32
    %333 = vector.broadcast %cst_59 : f32 to vector<16x32xf32>
    %334 = arith.addf %332, %333 : vector<16x32xf32>
    %335 = arith.mulf %334, %321 : vector<16x32xf32>
    %cst_60 = arith.constant 0.000000e+00 : f32
    %336 = vector.broadcast %cst_60 : f32 to vector<16x32xf32>
    %337 = arith.subf %336, %315 : vector<16x32xf32>
    %338 = arith.mulf %337, %315 : vector<16x32xf32>
    %339 = math.exp %338 : vector<16x32xf32>
    %340 = arith.mulf %335, %339 : vector<16x32xf32>
    %cst_61 = arith.constant 1.000000e+00 : f32
    %341 = vector.broadcast %cst_61 : f32 to vector<16x32xf32>
    %342 = arith.subf %341, %340 : vector<16x32xf32>
    %cst_62 = arith.constant 0.000000e+00 : f32
    %343 = vector.broadcast %cst_62 : f32 to vector<16x32xf32>
    %344 = arith.cmpf oge, %314, %343 : vector<16x32xf32>
    %cst_63 = arith.constant 0.000000e+00 : f32
    %345 = vector.broadcast %cst_63 : f32 to vector<16x32xf32>
    %346 = arith.subf %345, %342 : vector<16x32xf32>
    %347 = arith.select %344, %342, %346 : vector<16x32xi1>, vector<16x32xf32>
    %cst_64 = arith.constant 1.000000e+00 : f32
    %348 = vector.broadcast %cst_64 : f32 to vector<16x32xf32>
    %349 = arith.addf %348, %347 : vector<16x32xf32>
    %350 = arith.mulf %312, %349 : vector<16x32xf32>
    %cst_65 = arith.constant dense<0.000000e+00> : vector<16x32xf32>
    %351 = tpu.matmul %350, %5, %cst_65 {dimension_numbers = #tpu.dot_dimension_numbers<[1], [0], [0], [1], [0, 0, 1, 1], [], []>} : vector<16x32xf32>, vector<32x32xf32>, vector<16x32xf32> -> vector<16x32xf32>
    %352 = vector.broadcast %10 : vector<1x32xf32> to vector<16x32xf32>
    %353 = arith.addf %351, %352 : vector<16x32xf32>
    %354 = arith.addf %353, %307 : vector<16x32xf32>
    %c0_66 = arith.constant 0 : index
    %c0_67 = arith.constant 0 : index
    %355 = vector.load %arg3[%c0_66, %c0_67] : memref<16x32xf32, #tpu.memory_space<vmem>>, vector<16x32xf32>
    tpu.vector_store %arg3[%c0_66, %c0_67], %354 {strides = array<i32>} : memref<16x32xf32, #tpu.memory_space<vmem>>, vector<16x32xf32>,
    return
  }
  func.func @transform_0(%arg0: i32) -> (i32, i32) {
    %c0_i32 = arith.constant 0 : i32
    %c0_i32_0 = arith.constant 0 : i32
    %c0_i32_1 = arith.constant 0 : i32
    return %c0_i32, %c0_i32_0 : i32, i32
  }
  func.func @transform_1(%arg0: i32) -> (i32, i32) {
    %c0_i32 = arith.constant 0 : i32
    %c0_i32_0 = arith.constant 0 : i32
    return %arg0, %c0_i32 : i32, i32
  }
  func.func @transform_2(%arg0: i32) -> (i32, i32) {
    %c0_i32 = arith.constant 0 : i32
    %c0_i32_0 = arith.constant 0 : i32
    return %arg0, %c0_i32 : i32, i32
  }
}

</mosaic_0001>

<llo_original>
// kernel: tpu_custom_call.1
$region0: #{tpu_custom_call.1}
  #allocation0 [shape = 'u32[]', space=smem, size = 0x4, offset = 0x4, fixed_abs, tag = 'smem constant byte address 0x4 - core index']
  #allocation1 [shape = 'u32[144,128]{1,0:T(1,128)}', space=vmem, size = 0x12000, scoped, tag = 'internal scratch']
  %s0 = inlined_call_operand.vmem [shape: f32[200,32], index: 0, kind: input, shape index: {}]
  %s1 = inlined_call_operand.vmem [shape: f32[32,32], index: 1, kind: input, shape index: {}]
  %s2 = inlined_call_operand.hbm [shape: f32[32,32], index: 2, kind: output, shape index: {}]
  %s3 = sld [smem:[#allocation0]]
  $region41: #{tpu_custom_call.1} parent=0
    _
  %s5 = ssub.s32 1, %s3
  %s6 = scalar_select 0, %s5, %s3
  $region1: #{tpu_custom_call.1} parent=0
    #allocation2 [shape = 'u8[16384]{0}', space=vmem, size = 0x4000, scoped, tag = 'output window, operand 0']
    #allocation3 [shape = 's32[2]{0}', space=sflag, size = 0x8, scoped, tag = 'scoped memory for tpu_custom_call.1']
    %7 = vsyncpa [#allocation3], 0
    %s8 = scalar_lea.sflag [#allocation3], 1
    %9 = vsyncpa %s8, 0
    loop: start=0, step=1, limit=4
    $region2: #{tpu_custom_call.1} parent=1 // loop_pre_header
      _
    $region3: #{tpu_custom_call.1} parent=1 // loop_header
      %s11 = sphi 0, %s15
      %p12 = scmp.ge.s32.totalorder %s11, 4
      %s19 = sphi 0, %s19
      %s21 = sphi 0, %s19
      %s22 = sphi 0, %s21
      %s36 = sphi 0, %s22
      %s42 = sphi 0, %s44
      %s45 = sphi 0, %s42
      %s46 = sphi 0, %s45
      %s62 = sphi 0, %s46
      %s68 = sphi 0, %s70
      %s71 = sphi 0, %s68
      %s72 = sphi 0, %s71
      %s88 = sphi 0, %s72
    $region4: #{tpu_custom_call.1} parent=1 // loop_header_branch
      %14 = sbr.rel (%p12) target = $region8
    $region5: #{tpu_custom_call.1} parent=1 // loop_body
      %s16 = ssub.s32 %s11, 1
      %s17 = ssub.s32 %s11, 2
      %s18 = sadd.s32 %s11, 1
      %s20 = sadd.s32 %s19, 1
      %p23 = scmp.eq.s32.totalorder %s11, 1
      %p24 = scmp.ne.s32.totalorder %s19, %s21
      %p25 = scmp.eq.s32.totalorder %s11, 0
      %p26 = por %p24, %p25
      %p27 = scmp.ne.s32.totalorder %s19, %s21
      %p28 = scmp.eq.s32.totalorder %s16, 1
      %p29 = por %p27, %p28
      %p30 = scmp.ne.s32.totalorder %s21, %s22
      %p31 = scmp.eq.s32.totalorder %s16, 0
      %p32 = por %p30, %p31
      %p33 = scmp.ne.s32.totalorder %s21, %s22
      %p34 = scmp.eq.s32.totalorder %s17, 1
      %p35 = por %p33, %p34
      %p37 = scmp.ne.s32.totalorder %s22, %s36
      %p38 = scmp.eq.s32.totalorder %s17, 0
      %p39 = por %p37, %p38
      %s40 = ssub.s32 %s11, %s18
      %p41 = scmp.eq.s32.totalorder %s40, 0
      %s43 = sadd.s32 %s42, 1
      %s44 = scalar_select %p41, %s42, %s43
      %p47 = pneg %p41
      %p48 = scmp.eq.s32.totalorder %s11, 1
      %p49 = por %p47, %p48
      %p50 = scmp.ne.s32.totalorder %s42, %s45
      %p51 = scmp.eq.s32.totalorder %s11, 0
      %p52 = por %p50, %p51
      %p53 = scmp.ne.s32.totalorder %s42, %s45
      %p54 = scmp.eq.s32.totalorder %s16, 1
      %p55 = por %p53, %p54
      %p56 = scmp.ne.s32.totalorder %s45, %s46
      %p57 = scmp.eq.s32.totalorder %s16, 0
      %p58 = por %p56, %p57
      %p59 = scmp.ne.s32.totalorder %s45, %s46
      %p60 = scmp.eq.s32.totalorder %s17, 1
      %p61 = por %p59, %p60
      %p63 = scmp.ne.s32.totalorder %s46, %s62
      %p64 = scmp.eq.s32.totalorder %s17, 0
      %p65 = por %p63, %p64
      %s66 = ssub.s32 %s11, %s18
      %p67 = scmp.eq.s32.totalorder %s66, 0
      %s69 = sadd.s32 %s68, 1
      %s70 = scalar_select %p67, %s68, %s69
      %p73 = pneg %p67
      %p74 = scmp.eq.s32.totalorder %s11, 1
      %p75 = por %p73, %p74
      %p76 = scmp.ne.s32.totalorder %s68, %s71
      %p77 = scmp.eq.s32.totalorder %s11, 0
      %p78 = por %p76, %p77
      %p79 = scmp.ne.s32.totalorder %s68, %s71
      %p80 = scmp.eq.s32.totalorder %s16, 1
      %p81 = por %p79, %p80
      %p82 = scmp.ne.s32.totalorder %s71, %s72
      %p83 = scmp.eq.s32.totalorder %s16, 0
      %p84 = por %p82, %p83
      %p85 = scmp.ne.s32.totalorder %s71, %s72
      %p86 = scmp.eq.s32.totalorder %s17, 1
      %p87 = por %p85, %p86
      %p89 = scmp.ne.s32.totalorder %s72, %s88
      %p90 = scmp.eq.s32.totalorder %s17, 0
      %p91 = por %p89, %p90
      %p92 = scmp.le.s32.totalorder 1, %s11
      %p93 = scmp.lt.s32.totalorder %s11, 3
      %p94 = pnand %p92, %p93
      %p95 = pneg %p94
      // Predicated region
      $region9: #{tpu_custom_call.1} parent=5 // pred_check
        _
      $region10: #{tpu_custom_call.1} parent=5 // pred_check_branch
        %97 = sbr.rel (%p94) target = $region12
      $region11: #{tpu_custom_call.1} parent=5 // pred_region
        %s98 = ssub.s32 %s11, 1
        // Predicated region
        $region13: #{tpu_custom_call.1} parent=11 // pred_check
          %p99 = pneg %p32
        $region14: #{tpu_custom_call.1} parent=11 // pred_check_branch
          %101 = sbr.rel (%p99) target = $region16
        $region15: #{tpu_custom_call.1} parent=11 // pred_region
          _
        $region16: #{tpu_custom_call.1} parent=11 // pred_fallthru
          _
      $region12: #{tpu_custom_call.1} parent=5 // pred_fallthru
        _
      %p102 = scmp.lt.s32.totalorder %s11, 2
      // Predicated region
      $region17: #{tpu_custom_call.1} parent=5 // pred_check
        %p103 = pneg %p102
      $region18: #{tpu_custom_call.1} parent=5 // pred_check_branch
        %105 = sbr.rel (%p103) target = $region20
      $region19: #{tpu_custom_call.1} parent=5 // pred_region
        // Predicated region
        $region21: #{tpu_custom_call.1} parent=19 // pred_check
          %p106 = pneg %p52
        $region22: #{tpu_custom_call.1} parent=19 // pred_check_branch
          %108 = sbr.rel (%p106) target = $region24
        $region23: #{tpu_custom_call.1} parent=19 // pred_region
          %s109 = smul.u32 2, %s11
          %p110 = scmp.lt.s32.totalorder %s109, 3
          %s111 = scalar_select %p110, %s109, 3
          %s112 = smul.addr %s111, 8
          %s113 = scalar_lea.vmem %s1, %s112
          %s114 = smul.u32 2, %s11
        $region24: #{tpu_custom_call.1} parent=19 // pred_fallthru
          _
      $region20: #{tpu_custom_call.1} parent=5 // pred_fallthru
        _
      %p115 = scmp.le.s32.totalorder 1, %s11
      %p116 = scmp.lt.s32.totalorder %s11, 3
      %p117 = pnand %p115, %p116
      %p118 = pneg %p117
      // Predicated region
      $region25: #{tpu_custom_call.1} parent=5 // pred_check
        _
      $region26: #{tpu_custom_call.1} parent=5 // pred_check_branch
        %120 = sbr.rel (%p117) target = $region28
      $region27: #{tpu_custom_call.1} parent=5 // pred_region
        %s121 = ssub.s32 %s11, 1
        %p122 = pneg %p32
        %p123 = pneg %p29
        %s124 = smul.u32 2, %s16
        %p125 = scmp.lt.s32.totalorder %s124, 3
        %s126 = scalar_select %p125, %s124, 3
        %s127 = smul.addr %s126, 8
        %s128 = scalar_lea.vmem %s1, %s127
        %p129 = pneg %p58
        %p130 = pneg %p55
        %p131 = pneg %p84
        %p132 = pneg %p81
        %s133 = sand.u32 %s71, 1
        %s134 = scalar_lea.sflag [#allocation3], %s133
        %s135 = sand.u32 %s71, 1
        %s136 = smul.addr %s135, 16
        %s137 = scalar_lea.vmem [#allocation2], %s136
        %s138 = smul.u32 2, %s16
        %p139 = scmp.lt.s32.totalorder %s138, 3
        %s140 = scalar_select %p139, %s138, 3
        %s141 = smul.addr %s140, 8
        %s142 = scalar_lea.vmem %s1, %s141
        %s143 = smul.u32 2, %s16
        %s144 = smul.u32 2, %s16
        %v145 = vld [vmem:[%s142] sm:$0xff]
        %v146 = vld [vmem:[%s142 + $0x8] sm:$0xff]
        %v147 = vld [vmem:[%s0] sm:$0xff]
        %v148 = vld [vmem:[%s0 + $0x8] sm:$0xff]
        %v149 = vld [vmem:[%s0 + $0x10] sm:$0xff]
        %v150 = vld [vmem:[%s0 + $0x18] sm:$0xff]
        %v151 = vld [vmem:[%s0 + $0x20] sm:$0xff]
        %v152 = vld [vmem:[%s0 + $0x28] sm:$0xff]
        %v153 = vld [vmem:[%s0 + $0x30] sm:$0xff]
        %v154 = vld [vmem:[%s0 + $0x38] sm:$0xff]
        %v155 = vld [vmem:[%s0 + $0x40] sm:$0xff]
        %v156 = vld [vmem:[%s0 + $0x48] sm:$0xff]
        %v157 = vld [vmem:[%s0 + $0x50] sm:$0xff]
        %v158 = vld [vmem:[%s0 + $0x58] sm:$0xff]
        %v159 = vld [vmem:[%s0 + $0x60] sm:$0xff]
        %v160 = vld [vmem:[%s0 + $0x68] sm:$0xff]
        %v161 = vld [vmem:[%s0 + $0x70] sm:$0xff]
        %v162 = vld [vmem:[%s0 + $0x78] sm:$0xff]
        %v163 = vld [vmem:[%s0 + $0x80] sm:$0xff]
        %v164 = vld [vmem:[%s0 + $0x88] sm:$0xff]
        %v165 = vld [vmem:[%s0 + $0x90] sm:$0xff]
        %v166 = vld [vmem:[%s0 + $0x98] sm:$0xff]
        %v167 = vld [vmem:[%s0 + $0xa0] sm:$0xff]
        %v168 = vld [vmem:[%s0 + $0xa8] sm:$0xff]
        %v169 = vld [vmem:[%s0 + $0xb0] sm:$0xff]
        %v170 = vld [vmem:[%s0 + $0xb8] sm:$0xff]
        %v171 = vld [vmem:[%s0 + $0xc0] sm:$0x1]
        %v172 = vld [vmem:[%s0 + $0xc1] sm:$0x1]
        %v173 = vld [vmem:[%s0 + $0xc2] sm:$0x1]
        %v174 = vld [vmem:[%s0 + $0xc3] sm:$0x1]
        %v175 = vld [vmem:[%s0 + $0xc4] sm:$0x1]
        %v176 = vlaneseq
        %v177 = vshrl.u32 %v176, 7
        %v178 = vsub.s32 0, %v177
        %v179 = vrot.slane %v171, %v178
        %vm180 = vcmask 261120
        %v182 = vsel %vm180, %v145, 0
        %v185 = vsel %vm180, %v146, 0
        %187 = vmatprep.subr.mxu0 0.0
        %188 = vmatpush1.msra.mxu0 %v147
        %189 = vmatprep.subr.mxu0 0.0
        %190 = vmatpush1.msra.mxu0 %v148
        %191 = vmatprep.subr.mxu0 0.0
        %192 = vmatpush1.msra.mxu0 %v149
        %193 = vmatprep.subr.mxu0 0.0
        %194 = vmatpush1.msra.mxu0 %v150
        %195 = vmatprep.subr.mxu0 0.0
        %196 = vmatpush1.msra.mxu0 0.0
        %197 = vmatprep.subr.mxu0 0.0
        %198 = vmatpush1.msra.mxu0 0.0
        %199 = vmatprep.subr.mxu0 0.0
        %200 = vmatpush1.msra.mxu0 0.0
        %201 = vmatprep.subr.mxu0 0.0
        %202 = vmatpush1.msra.mxu0 0.0
        %203 = vmatprep.subr.mxu0 0.0
        %204 = vmatpush1.msra.mxu0 0.0
        %205 = vmatprep.subr.mxu0 0.0
        %206 = vmatpush1.msra.mxu0 0.0
        %207 = vmatprep.subr.mxu0 0.0
        %208 = vmatpush1.msra.mxu0 0.0
        %209 = vmatprep.subr.mxu0 0.0
        %210 = vmatpush1.msra.mxu0 0.0
        %211 = vmatprep.subr.mxu0 0.0
        %212 = vmatpush1.msra.mxu0 0.0
        %213 = vmatprep.subr.mxu0 0.0
        %214 = vmatpush1.msra.mxu0 0.0
        %215 = vmatprep.subr.mxu0 0.0
        %216 = vmatpush1.msra.mxu0 0.0
        %217 = vmatprep.subr.mxu0 0.0
        %218 = vmatpush1.msra.mxu0 0.0
        %219 = vmatprep.subr.mxu0 0.0
        %220 = vmatpush1.msra.mxu0 0.0
        %221 = vmatprep.subr.mxu0 0.0
        %222 = vmatpush1.msra.mxu0 0.0
        %223 = vmatprep.subr.mxu0 0.0
        %224 = vmatpush1.msra.mxu0 0.0
        %225 = vmatprep.subr.mxu0 0.0
        %226 = vmatpush1.msra.mxu0 0.0
        %227 = vmatprep.subr.mxu0 0.0
        %228 = vmatpush1.msra.mxu0 0.0
        %229 = vmatprep.subr.mxu0 0.0
        %230 = vmatpush1.msra.mxu0 0.0
        %231 = vmatprep.subr.mxu0 0.0
        %232 = vmatpush1.msra.mxu0 0.0
        %233 = vmatprep.subr.mxu0 0.0
        %234 = vmatpush1.msra.mxu0 0.0
        %235 = vmatprep.subr.mxu0 0.0
        %236 = vmatpush1.msra.mxu0 0.0
        %237 = vmatprep.subr.mxu0 0.0
        %238 = vmatpush1.msra.mxu0 0.0
        %239 = vmatprep.subr.mxu0 0.0
        %240 = vmatpush1.msra.mxu0 0.0
        %241 = vmatprep.subr.mxu0 0.0
        %242 = vmatpush1.msra.mxu0 0.0
        %243 = vmatprep.subr.mxu0 0.0
        %244 = vmatpush1.msra.mxu0 0.0
        %245 = vmatprep.subr.mxu0 0.0
        %246 = vmatpush1.msra.mxu0 0.0
        %247 = vmatprep.subr.mxu0 0.0
        %248 = vmatpush1.msra.mxu0 0.0
        %249 = vmatprep.subr.mxu0 0.0
        %250 = vmatpush1.msra.mxu0 0.0
        %251 = vmatprep.mubr.f32.mxu0 0.0
        %252 = vmatmul.mubr.f32.gmra.mrb[0].mxu0 %v182
        %v253 = vpop.f32.mrb[0].mxu0
        %v254 = vadd.f32 %v179, %v253
        %v255 = vpop.f32.mrb[0].mxu0
        %256 = vmatprep.mubr.f32.mxu0 0.0
        %257 = vmatmul.mubr.f32.gmra.mrb[0].mxu0 %v185
        %v258 = vpop.f32.mrb[0].mxu0
        %v259 = vadd.f32 %v179, %v258
        %v260 = vpop.f32.mrb[0].mxu0
        %261 = vdwg.mxu0
        %262 = vmatprep.subr.mxu0 0.0
        %263 = vmatpush1.xpose.msra.mxu0 %v182
        %264 = vmatprep.subr.mxu0 0.0
        %265 = vmatpush1.xpose.msra.mxu0 %v185
        %266 = vmatprep.subr.mxu0 0.0
        %267 = vmatpush1.xpose.msra.mxu0 0.0
        %268 = vmatprep.subr.mxu0 0.0
        %269 = vmatpush1.xpose.msra.mxu0 0.0
        %270 = vmatprep.subr.mxu0 0.0
        %271 = vmatpush1.xpose.msra.mxu0 0.0
        %272 = vmatprep.subr.mxu0 0.0
        %273 = vmatpush1.xpose.msra.mxu0 0.0
        %274 = vmatprep.subr.mxu0 0.0
        %275 = vmatpush1.xpose.msra.mxu0 0.0
        %276 = vmatprep.subr.mxu0 0.0
        %277 = vmatpush1.xpose.msra.mxu0 0.0
        %278 = vmatprep.subr.mxu0 0.0
        %279 = vmatpush1.xpose.msra.mxu0 0.0
        %280 = vmatprep.subr.mxu0 0.0
        %281 = vmatpush1.xpose.msra.mxu0 0.0
        %282 = vmatprep.subr.mxu0 0.0
        %283 = vmatpush1.xpose.msra.mxu0 0.0
        %284 = vmatprep.subr.mxu0 0.0
        %285 = vmatpush1.xpose.msra.mxu0 0.0
        %286 = vmatprep.subr.mxu0 0.0
        %287 = vmatpush1.xpose.msra.mxu0 0.0
        %288 = vmatprep.subr.mxu0 0.0
        %289 = vmatpush1.xpose.msra.mxu0 0.0
        %290 = vmatprep.subr.mxu0 0.0
        %291 = vmatpush1.xpose.msra.mxu0 0.0
        %292 = vmatprep.subr.mxu0 0.0
        %293 = vmatpush1.xpose.msra.mxu0 0.0
        %294 = vmatprep.subr.mxu0 0.0
        %295 = vmatpush1.xpose.msra.mxu0 0.0
        %296 = vmatprep.subr.mxu0 0.0
        %297 = vmatpush1.xpose.msra.mxu0 0.0
        %298 = vmatprep.subr.mxu0 0.0
        %299 = vmatpush1.xpose.msra.mxu0 0.0
        %300 = vmatprep.subr.mxu0 0.0
        %301 = vmatpush1.xpose.msra.mxu0 0.0
        %302 = vmatprep.subr.mxu0 0.0
        %303 = vmatpush1.xpose.msra.mxu0 0.0
        %304 = vmatprep.subr.mxu0 0.0
        %305 = vmatpush1.xpose.msra.mxu0 0.0
        %306 = vmatprep.subr.mxu0 0.0
        %307 = vmatpush1.xpose.msra.mxu0 0.0
        %308 = vmatprep.subr.mxu0 0.0
        %309 = vmatpush1.xpose.msra.mxu0 0.0
        %310 = vmatprep.subr.mxu0 0.0
        %311 = vmatpush1.xpose.msra.mxu0 0.0
        %312 = vmatprep.subr.mxu0 0.0
        %313 = vmatpush1.xpose.msra.mxu0 0.0
        %314 = vmatprep.subr.mxu0 0.0
        %315 = vmatpush1.xpose.msra.mxu0 0.0
        %316 = vmatprep.subr.mxu0 0.0
        %317 = vmatpush1.xpose.msra.mxu0 0.0
        %318 = vmatprep.subr.mxu0 0.0
        %319 = vmatpush1.xpose.msra.mxu0 0.0
        %320 = vmatprep.subr.mxu0 0.0
        %321 = vmatpush1.xpose.msra.mxu0 0.0
        %322 = vmatprep.subr.mxu0 0.0
        %323 = vmatpush1.xpose.msra.mxu0 0.0
        %324 = vmatprep.subr.mxu0 0.0
        %325 = vmatpush1.xpose.msra.mxu0 0.0
        %326 = vmatprep.mubr.f32.mxu0 0.0
        %327 = vmatmul.mubr.f32.gmra.mrb[0].mxu0 %v182
        %v328 = vpop.f32.mrb[0].mxu0
        %v329 = vadd.f32 0.0, %v328
        %v330 = vpop.f32.mrb[0].mxu0
        %331 = vmatprep.mubr.f32.mxu0 0.0
        %332 = vmatmul.mubr.f32.gmra.mrb[0].mxu0 %v185
        %v333 = vpop.f32.mrb[0].mxu0
        %v334 = vadd.f32 0.0, %v333
        %v335 = vpop.f32.mrb[0].mxu0
        %336 = vdwg.mxu0
        %338 = vset.pattern.permute.xlu0 0
        %339 = vperm.xlu0 %338, %v329
        %v340 = vpop.permute.xlu0 %339
        %343 = vset.pattern.permute.xlu0 0
        %344 = vperm.xlu0 %343, %v334
        %v345 = vpop.permute.xlu0 %344
        %vm347 = vcmp.gt.f32.partialorder %v340, %v329
        %vm348 = vcmp.gt.f32.partialorder %v345, %v334
        %v349 = vsel %vm347, 1, 0
        %v350 = vsel %vm348, 1, 0
        %v351 = vcvt.s32.f32 %v349
        %v352 = vcvt.s32.f32 %v350
        %v353 = vadd.f32 %v351, 0.0
        %v354 = vadd.f32 %v352, 0.0
        %355 = vset.pattern.permute.xlu0 1
        %356 = vperm.xlu0 %355, %v329
        %v357 = vpop.permute.xlu0 %356
        %359 = vset.pattern.permute.xlu0 1
        %360 = vperm.xlu0 %359, %v334
        %v361 = vpop.permute.xlu0 %360
        %vm363 = vcmp.gt.f32.partialorder %v357, %v329
        %vm364 = vcmp.gt.f32.partialorder %v361, %v334
        %v365 = vsel %vm363, 1, 0
        %v366 = vsel %vm364, 1, 0
        %v367 = vcvt.s32.f32 %v365
        %v368 = vcvt.s32.f32 %v366
        %v369 = vadd.f32 %v353, %v367
        %v370 = vadd.f32 %v354, %v368
        %371 = vset.pattern.permute.xlu0 2
        %372 = vperm.xlu0 %371, %v329
        %v373 = vpop.permute.xlu0 %372
        %375 = vset.pattern.permute.xlu0 2
        %376 = vperm.xlu0 %375, %v334
        %v377 = vpop.permute.xlu0 %376
        %vm379 = vcmp.gt.f32.partialorder %v373, %v329
        %vm380 = vcmp.gt.f32.partialorder %v377, %v334
        %v381 = vsel %vm379, 1, 0
        %v382 = vsel %vm380, 1, 0
        %v383 = vcvt.s32.f32 %v381
        %v384 = vcvt.s32.f32 %v382
        %v385 = vadd.f32 %v369, %v383
        %v386 = vadd.f32 %v370, %v384
        %387 = vset.pattern.permute.xlu0 3
        %388 = vperm.xlu0 %387, %v329
        %v389 = vpop.permute.xlu0 %388
        %391 = vset.pattern.permute.xlu0 3
        %392 = vperm.xlu0 %391, %v334
        %v393 = vpop.permute.xlu0 %392
        %vm395 = vcmp.gt.f32.partialorder %v389, %v329
        %vm396 = vcmp.gt.f32.partialorder %v393, %v334
        %v397 = vsel %vm395, 1, 0
        %v398 = vsel %vm396, 1, 0
        %v399 = vcvt.s32.f32 %v397
        %v400 = vcvt.s32.f32 %v398
        %v401 = vadd.f32 %v385, %v399
        %v402 = vadd.f32 %v386, %v400
        %403 = vset.pattern.permute.xlu0 4
        %404 = vperm.xlu0 %403, %v329
        %v405 = vpop.permute.xlu0 %404
        %407 = vset.pattern.permute.xlu0 4
        %408 = vperm.xlu0 %407, %v334
        %v409 = vpop.permute.xlu0 %408
        %vm411 = vcmp.gt.f32.partialorder %v405, %v329
        %vm412 = vcmp.gt.f32.partialorder %v409, %v334
        %v413 = vsel %vm411, 1, 0
        %v414 = vsel %vm412, 1, 0
        %v415 = vcvt.s32.f32 %v413
        %v416 = vcvt.s32.f32 %v414
        %v417 = vadd.f32 %v401, %v415
        %v418 = vadd.f32 %v402, %v416
        %419 = vset.pattern.permute.xlu0 5
        %420 = vperm.xlu0 %419, %v329
        %v421 = vpop.permute.xlu0 %420
        %423 = vset.pattern.permute.xlu0 5
        %424 = vperm.xlu0 %423, %v334
        %v425 = vpop.permute.xlu0 %424
        %vm427 = vcmp.gt.f32.partialorder %v421, %v329
        %vm428 = vcmp.gt.f32.partialorder %v425, %v334
        %v429 = vsel %vm427, 1, 0
        %v430 = vsel %vm428, 1, 0
        %v431 = vcvt.s32.f32 %v429
        %v432 = vcvt.s32.f32 %v430
        %v433 = vadd.f32 %v417, %v431
        %v434 = vadd.f32 %v418, %v432
        %435 = vset.pattern.permute.xlu0 6
        %436 = vperm.xlu0 %435, %v329
        %v437 = vpop.permute.xlu0 %436
        %439 = vset.pattern.permute.xlu0 6
        %440 = vperm.xlu0 %439, %v334
        %v441 = vpop.permute.xlu0 %440
        %vm443 = vcmp.gt.f32.partialorder %v437, %v329
        %vm444 = vcmp.gt.f32.partialorder %v441, %v334
        %v445 = vsel %vm443, 1, 0
        %v446 = vsel %vm444, 1, 0
        %v447 = vcvt.s32.f32 %v445
        %v448 = vcvt.s32.f32 %v446
        %v449 = vadd.f32 %v433, %v447
        %v450 = vadd.f32 %v434, %v448
        %451 = vset.pattern.permute.xlu0 7
        %452 = vperm.xlu0 %451, %v329
        %v453 = vpop.permute.xlu0 %452
        %455 = vset.pattern.permute.xlu0 7
        %456 = vperm.xlu0 %455, %v334
        %v457 = vpop.permute.xlu0 %456
        %vm459 = vcmp.gt.f32.partialorder %v453, %v329
        %vm460 = vcmp.gt.f32.partialorder %v457, %v334
        %v461 = vsel %vm459, 1, 0
        %v462 = vsel %vm460, 1, 0
        %v463 = vcvt.s32.f32 %v461
        %v464 = vcvt.s32.f32 %v462
        %v465 = vadd.f32 %v449, %v463
        %v466 = vadd.f32 %v450, %v464
        %467 = vset.pattern.permute.xlu0 8
        %468 = vperm.xlu0 %467, %v329
        %v469 = vpop.permute.xlu0 %468
        %471 = vset.pattern.permute.xlu0 8
        %472 = vperm.xlu0 %471, %v334
        %v473 = vpop.permute.xlu0 %472
        %vm475 = vcmp.gt.f32.partialorder %v469, %v329
        %vm476 = vcmp.gt.f32.partialorder %v473, %v334
        %v477 = vsel %vm475, 1, 0
        %v478 = vsel %vm476, 1, 0
        %v479 = vcvt.s32.f32 %v477
        %v480 = vcvt.s32.f32 %v478
        %v481 = vadd.f32 %v465, %v479
        %v482 = vadd.f32 %v466, %v480
        %483 = vset.pattern.permute.xlu0 9
        %484 = vperm.xlu0 %483, %v329
        %v485 = vpop.permute.xlu0 %484
        %487 = vset.pattern.permute.xlu0 9
        %488 = vperm.xlu0 %487, %v334
        %v489 = vpop.permute.xlu0 %488
        %vm491 = vcmp.gt.f32.partialorder %v485, %v329
        %vm492 = vcmp.gt.f32.partialorder %v489, %v334
        %v493 = vsel %vm491, 1, 0
        %v494 = vsel %vm492, 1, 0
        %v495 = vcvt.s32.f32 %v493
        %v496 = vcvt.s32.f32 %v494
        %v497 = vadd.f32 %v481, %v495
        %v498 = vadd.f32 %v482, %v496
        %499 = vset.pattern.permute.xlu0 10
        %500 = vperm.xlu0 %499, %v329
        %v501 = vpop.permute.xlu0 %500
        %503 = vset.pattern.permute.xlu0 10
        %504 = vperm.xlu0 %503, %v334
        %v505 = vpop.permute.xlu0 %504
        %vm507 = vcmp.gt.f32.partialorder %v501, %v329
        %vm508 = vcmp.gt.f32.partialorder %v505, %v334
        %v509 = vsel %vm507, 1, 0
        %v510 = vsel %vm508, 1, 0
        %v511 = vcvt.s32.f32 %v509
        %v512 = vcvt.s32.f32 %v510
        %v513 = vadd.f32 %v497, %v511
        %v514 = vadd.f32 %v498, %v512
        %515 = vset.pattern.permute.xlu0 11
        %516 = vperm.xlu0 %515, %v329
        %v517 = vpop.permute.xlu0 %516
        %519 = vset.pattern.permute.xlu0 11
        %520 = vperm.xlu0 %519, %v334
        %v521 = vpop.permute.xlu0 %520
        %vm523 = vcmp.gt.f32.partialorder %v517, %v329
        %vm524 = vcmp.gt.f32.partialorder %v521, %v334
        %v525 = vsel %vm523, 1, 0
        %v526 = vsel %vm524, 1, 0
        %v527 = vcvt.s32.f32 %v525
        %v528 = vcvt.s32.f32 %v526
        %v529 = vadd.f32 %v513, %v527
        %v530 = vadd.f32 %v514, %v528
        %531 = vset.pattern.permute.xlu0 12
        %532 = vperm.xlu0 %531, %v329
        %v533 = vpop.permute.xlu0 %532
        %535 = vset.pattern.permute.xlu0 12
        %536 = vperm.xlu0 %535, %v334
        %v537 = vpop.permute.xlu0 %536
        %vm539 = vcmp.gt.f32.partialorder %v533, %v329
        %vm540 = vcmp.gt.f32.partialorder %v537, %v334
        %v541 = vsel %vm539, 1, 0
        %v542 = vsel %vm540, 1, 0
        %v543 = vcvt.s32.f32 %v541
        %v544 = vcvt.s32.f32 %v542
        %v545 = vadd.f32 %v529, %v543
        %v546 = vadd.f32 %v530, %v544
        %547 = vset.pattern.permute.xlu0 13
        %548 = vperm.xlu0 %547, %v329
        %v549 = vpop.permute.xlu0 %548
        %551 = vset.pattern.permute.xlu0 13
        %552 = vperm.xlu0 %551, %v334
        %v553 = vpop.permute.xlu0 %552
        %vm555 = vcmp.gt.f32.partialorder %v549, %v329
        %vm556 = vcmp.gt.f32.partialorder %v553, %v334
        %v557 = vsel %vm555, 1, 0
        %v558 = vsel %vm556, 1, 0
        %v559 = vcvt.s32.f32 %v557
        %v560 = vcvt.s32.f32 %v558
        %v561 = vadd.f32 %v545, %v559
        %v562 = vadd.f32 %v546, %v560
        %563 = vset.pattern.permute.xlu0 14
        %564 = vperm.xlu0 %563, %v329
        %v565 = vpop.permute.xlu0 %564
        %567 = vset.pattern.permute.xlu0 14
        %568 = vperm.xlu0 %567, %v334
        %v569 = vpop.permute.xlu0 %568
        %vm571 = vcmp.gt.f32.partialorder %v565, %v329
        %vm572 = vcmp.gt.f32.partialorder %v569, %v334
        %v573 = vsel %vm571, 1, 0
        %v574 = vsel %vm572, 1, 0
        %v575 = vcvt.s32.f32 %v573
        %v576 = vcvt.s32.f32 %v574
        %v577 = vadd.f32 %v561, %v575
        %v578 = vadd.f32 %v562, %v576
        %579 = vset.pattern.permute.xlu0 15
        %580 = vperm.xlu0 %579, %v329
        %v581 = vpop.permute.xlu0 %580
        %583 = vset.pattern.permute.xlu0 15
        %584 = vperm.xlu0 %583, %v334
        %v585 = vpop.permute.xlu0 %584
        %vm587 = vcmp.gt.f32.partialorder %v581, %v329
        %vm588 = vcmp.gt.f32.partialorder %v585, %v334
        %v589 = vsel %vm587, 1, 0
        %v590 = vsel %vm588, 1, 0
        %v591 = vcvt.s32.f32 %v589
        %v592 = vcvt.s32.f32 %v590
        %v593 = vadd.f32 %v577, %v591
        %v594 = vadd.f32 %v578, %v592
        %vm595 = vcmp.lt.f32.partialorder %v593, 9.0
        %vm596 = vcmp.lt.f32.partialorder %v594, 9.0
        %v597 = vsel %vm595, 1, 0
        %v598 = vsel %vm596, 1, 0
        %599 = vset.pattern.permute.xlu0 0
        %600 = vperm.xlu0 %599, %v597
        %v601 = vpop.permute.xlu0 %600
        %602 = vset.pattern.permute.xlu0 0
        %603 = vperm.xlu0 %602, %v598
        %v604 = vpop.permute.xlu0 %603
        %vm605 = vcmp.eq.s32.totalorder %v601, 1
        %vm606 = vcmp.eq.s32.totalorder %v604, 1
        %v607 = vlaneseq
        %v608 = vshrl.u32 %v607, 7
        %v609 = vsub.s32 0, %v608
        %v610 = vrot.slane %v254, %v609
        %v611 = vsel %vm605, %v610, -inf
        %v612 = vsel %vm606, %v610, -inf
        %613 = vset.pattern.permute.xlu0 1
        %614 = vperm.xlu0 %613, %v597
        %v615 = vpop.permute.xlu0 %614
        %616 = vset.pattern.permute.xlu0 1
        %617 = vperm.xlu0 %616, %v598
        %v618 = vpop.permute.xlu0 %617
        %vm619 = vcmp.eq.s32.totalorder %v615, 1
        %vm620 = vcmp.eq.s32.totalorder %v618, 1
        %v621 = vlaneseq
        %v622 = vshrl.u32 %v621, 7
        %v623 = vsub.s32 1, %v622
        %v624 = vrot.slane %v254, %v623
        %v625 = vsel %vm619, %v624, -inf
        %v626 = vsel %vm620, %v624, -inf
        %v627 = vmax.f32 %v611, %v625
        %v628 = vmax.f32 %v612, %v626
        %629 = vset.pattern.permute.xlu0 2
        %630 = vperm.xlu0 %629, %v597
        %v631 = vpop.permute.xlu0 %630
        %632 = vset.pattern.permute.xlu0 2
        %633 = vperm.xlu0 %632, %v598
        %v634 = vpop.permute.xlu0 %633
        %vm635 = vcmp.eq.s32.totalorder %v631, 1
        %vm636 = vcmp.eq.s32.totalorder %v634, 1
        %v637 = vlaneseq
        %v638 = vshrl.u32 %v637, 7
        %v639 = vsub.s32 2, %v638
        %v640 = vrot.slane %v254, %v639
        %v641 = vsel %vm635, %v640, -inf
        %v642 = vsel %vm636, %v640, -inf
        %v643 = vmax.f32 %v627, %v641
        %v644 = vmax.f32 %v628, %v642
        %645 = vset.pattern.permute.xlu0 3
        %646 = vperm.xlu0 %645, %v597
        %v647 = vpop.permute.xlu0 %646
        %648 = vset.pattern.permute.xlu0 3
        %649 = vperm.xlu0 %648, %v598
        %v650 = vpop.permute.xlu0 %649
        %vm651 = vcmp.eq.s32.totalorder %v647, 1
        %vm652 = vcmp.eq.s32.totalorder %v650, 1
        %v653 = vlaneseq
        %v654 = vshrl.u32 %v653, 7
        %v655 = vsub.s32 3, %v654
        %v656 = vrot.slane %v254, %v655
        %v657 = vsel %vm651, %v656, -inf
        %v658 = vsel %vm652, %v656, -inf
        %v659 = vmax.f32 %v643, %v657
        %v660 = vmax.f32 %v644, %v658
        %661 = vset.pattern.permute.xlu0 4
        %662 = vperm.xlu0 %661, %v597
        %v663 = vpop.permute.xlu0 %662
        %664 = vset.pattern.permute.xlu0 4
        %665 = vperm.xlu0 %664, %v598
        %v666 = vpop.permute.xlu0 %665
        %vm667 = vcmp.eq.s32.totalorder %v663, 1
        %vm668 = vcmp.eq.s32.totalorder %v666, 1
        %v669 = vlaneseq
        %v670 = vshrl.u32 %v669, 7
        %v671 = vsub.s32 4, %v670
        %v672 = vrot.slane %v254, %v671
        %v673 = vsel %vm667, %v672, -inf
        %v674 = vsel %vm668, %v672, -inf
        %v675 = vmax.f32 %v659, %v673
        %v676 = vmax.f32 %v660, %v674
        %677 = vset.pattern.permute.xlu0 5
        %678 = vperm.xlu0 %677, %v597
        %v679 = vpop.permute.xlu0 %678
        %680 = vset.pattern.permute.xlu0 5
        %681 = vperm.xlu0 %680, %v598
        %v682 = vpop.permute.xlu0 %681
        %vm683 = vcmp.eq.s32.totalorder %v679, 1
        %vm684 = vcmp.eq.s32.totalorder %v682, 1
        %v685 = vlaneseq
        %v686 = vshrl.u32 %v685, 7
        %v687 = vsub.s32 5, %v686
        %v688 = vrot.slane %v254, %v687
        %v689 = vsel %vm683, %v688, -inf
        %v690 = vsel %vm684, %v688, -inf
        %v691 = vmax.f32 %v675, %v689
        %v692 = vmax.f32 %v676, %v690
        %693 = vset.pattern.permute.xlu0 6
        %694 = vperm.xlu0 %693, %v597
        %v695 = vpop.permute.xlu0 %694
        %696 = vset.pattern.permute.xlu0 6
        %697 = vperm.xlu0 %696, %v598
        %v698 = vpop.permute.xlu0 %697
        %vm699 = vcmp.eq.s32.totalorder %v695, 1
        %vm700 = vcmp.eq.s32.totalorder %v698, 1
        %v701 = vlaneseq
        %v702 = vshrl.u32 %v701, 7
        %v703 = vsub.s32 6, %v702
        %v704 = vrot.slane %v254, %v703
        %v705 = vsel %vm699, %v704, -inf
        %v706 = vsel %vm700, %v704, -inf
        %v707 = vmax.f32 %v691, %v705
        %v708 = vmax.f32 %v692, %v706
        %709 = vset.pattern.permute.xlu0 7
        %710 = vperm.xlu0 %709, %v597
        %v711 = vpop.permute.xlu0 %710
        %712 = vset.pattern.permute.xlu0 7
        %713 = vperm.xlu0 %712, %v598
        %v714 = vpop.permute.xlu0 %713
        %vm715 = vcmp.eq.s32.totalorder %v711, 1
        %vm716 = vcmp.eq.s32.totalorder %v714, 1
        %v717 = vlaneseq
        %v718 = vshrl.u32 %v717, 7
        %v719 = vsub.s32 7, %v718
        %v720 = vrot.slane %v254, %v719
        %v721 = vsel %vm715, %v720, -inf
        %v722 = vsel %vm716, %v720, -inf
        %v723 = vmax.f32 %v707, %v721
        %v724 = vmax.f32 %v708, %v722
        %725 = vset.pattern.permute.xlu0 8
        %726 = vperm.xlu0 %725, %v597
        %v727 = vpop.permute.xlu0 %726
        %728 = vset.pattern.permute.xlu0 8
        %729 = vperm.xlu0 %728, %v598
        %v730 = vpop.permute.xlu0 %729
        %vm731 = vcmp.eq.s32.totalorder %v727, 1
        %vm732 = vcmp.eq.s32.totalorder %v730, 1
        %v733 = vlaneseq
        %v734 = vshrl.u32 %v733, 7
        %v735 = vsub.s32 0, %v734
        %v736 = vrot.slane %v259, %v735
        %v737 = vsel %vm731, %v736, -inf
        %v738 = vsel %vm732, %v736, -inf
        %v739 = vmax.f32 %v723, %v737
        %v740 = vmax.f32 %v724, %v738
        %741 = vset.pattern.permute.xlu0 9
        %742 = vperm.xlu0 %741, %v597
        %v743 = vpop.permute.xlu0 %742
        %744 = vset.pattern.permute.xlu0 9
        %745 = vperm.xlu0 %744, %v598
        %v746 = vpop.permute.xlu0 %745
        %vm747 = vcmp.eq.s32.totalorder %v743, 1
        %vm748 = vcmp.eq.s32.totalorder %v746, 1
        %v749 = vlaneseq
        %v750 = vshrl.u32 %v749, 7
        %v751 = vsub.s32 1, %v750
        %v752 = vrot.slane %v259, %v751
        %v753 = vsel %vm747, %v752, -inf
        %v754 = vsel %vm748, %v752, -inf
        %v755 = vmax.f32 %v739, %v753
        %v756 = vmax.f32 %v740, %v754
        %757 = vset.pattern.permute.xlu0 10
        %758 = vperm.xlu0 %757, %v597
        %v759 = vpop.permute.xlu0 %758
        %760 = vset.pattern.permute.xlu0 10
        %761 = vperm.xlu0 %760, %v598
        %v762 = vpop.permute.xlu0 %761
        %vm763 = vcmp.eq.s32.totalorder %v759, 1
        %vm764 = vcmp.eq.s32.totalorder %v762, 1
        %v765 = vlaneseq
        %v766 = vshrl.u32 %v765, 7
        %v767 = vsub.s32 2, %v766
        %v768 = vrot.slane %v259, %v767
        %v769 = vsel %vm763, %v768, -inf
        %v770 = vsel %vm764, %v768, -inf
        %v771 = vmax.f32 %v755, %v769
        %v772 = vmax.f32 %v756, %v770
        %773 = vset.pattern.permute.xlu0 11
        %774 = vperm.xlu0 %773, %v597
        %v775 = vpop.permute.xlu0 %774
        %776 = vset.pattern.permute.xlu0 11
        %777 = vperm.xlu0 %776, %v598
        %v778 = vpop.permute.xlu0 %777
        %vm779 = vcmp.eq.s32.totalorder %v775, 1
        %vm780 = vcmp.eq.s32.totalorder %v778, 1
        %v781 = vlaneseq
        %v782 = vshrl.u32 %v781, 7
        %v783 = vsub.s32 3, %v782
        %v784 = vrot.slane %v259, %v783
        %v785 = vsel %vm779, %v784, -inf
        %v786 = vsel %vm780, %v784, -inf
        %v787 = vmax.f32 %v771, %v785
        %v788 = vmax.f32 %v772, %v786
        %789 = vset.pattern.permute.xlu0 12
        %790 = vperm.xlu0 %789, %v597
        %v791 = vpop.permute.xlu0 %790
        %792 = vset.pattern.permute.xlu0 12
        %793 = vperm.xlu0 %792, %v598
        %v794 = vpop.permute.xlu0 %793
        %vm795 = vcmp.eq.s32.totalorder %v791, 1
        %vm796 = vcmp.eq.s32.totalorder %v794, 1
        %v797 = vlaneseq
        %v798 = vshrl.u32 %v797, 7
        %v799 = vsub.s32 4, %v798
        %v800 = vrot.slane %v259, %v799
        %v801 = vsel %vm795, %v800, -inf
        %v802 = vsel %vm796, %v800, -inf
        %v803 = vmax.f32 %v787, %v801
        %v804 = vmax.f32 %v788, %v802
        %805 = vset.pattern.permute.xlu0 13
        %806 = vperm.xlu0 %805, %v597
        %v807 = vpop.permute.xlu0 %806
        %808 = vset.pattern.permute.xlu0 13
        %809 = vperm.xlu0 %808, %v598
        %v810 = vpop.permute.xlu0 %809
        %vm811 = vcmp.eq.s32.totalorder %v807, 1
        %vm812 = vcmp.eq.s32.totalorder %v810, 1
        %v813 = vlaneseq
        %v814 = vshrl.u32 %v813, 7
        %v815 = vsub.s32 5, %v814
        %v816 = vrot.slane %v259, %v815
        %v817 = vsel %vm811, %v816, -inf
        %v818 = vsel %vm812, %v816, -inf
        %v819 = vmax.f32 %v803, %v817
        %v820 = vmax.f32 %v804, %v818
        %821 = vset.pattern.permute.xlu0 14
        %822 = vperm.xlu0 %821, %v597
        %v823 = vpop.permute.xlu0 %822
        %824 = vset.pattern.permute.xlu0 14
        %825 = vperm.xlu0 %824, %v598
        %v826 = vpop.permute.xlu0 %825
        %vm827 = vcmp.eq.s32.totalorder %v823, 1
        %vm828 = vcmp.eq.s32.totalorder %v826, 1
        %v829 = vlaneseq
        %v830 = vshrl.u32 %v829, 7
        %v831 = vsub.s32 6, %v830
        %v832 = vrot.slane %v259, %v831
        %v833 = vsel %vm827, %v832, -inf
        %v834 = vsel %vm828, %v832, -inf
        %v835 = vmax.f32 %v819, %v833
        %v836 = vmax.f32 %v820, %v834
        %837 = vset.pattern.permute.xlu0 15
        %838 = vperm.xlu0 %837, %v597
        %v839 = vpop.permute.xlu0 %838
        %840 = vset.pattern.permute.xlu0 15
        %841 = vperm.xlu0 %840, %v598
        %v842 = vpop.permute.xlu0 %841
        %vm843 = vcmp.eq.s32.totalorder %v839, 1
        %vm844 = vcmp.eq.s32.totalorder %v842, 1
        %v845 = vlaneseq
        %v846 = vshrl.u32 %v845, 7
        %v847 = vsub.s32 7, %v846
        %v848 = vrot.slane %v259, %v847
        %v849 = vsel %vm843, %v848, -inf
        %v850 = vsel %vm844, %v848, -inf
        %v851 = vmax.f32 %v835, %v849
        %v852 = vmax.f32 %v836, %v850
        %v853 = vsub.f32 %v851, %v254
        %v854 = vsub.f32 %v852, %v259
        %857 = vrot.lane.b32.xlu0 %v853, 32
        %v858 = vpop.permute.xlu0 %857
        %859 = vrot.lane.b32.xlu0 %v854, 32
        %v860 = vpop.permute.xlu0 %859
        %v863 = vsel %vm180, %v254, %v858
        %v864 = vsel %vm180, %v259, %v860
        %v865 = vlaneseq
        %v866 = vshrl.u32 %v865, 7
        %v867 = vsub.s32 0, %v866
        %v868 = vrot.slane %v172, %v867
        %vm869 = vcmask 523264
        %v871 = vsel %vm869, %v863, 0
        %v874 = vsel %vm869, %v864, 0
        %876 = vmatprep.subr.mxu0 0.0
        %877 = vmatpush1.msra.mxu0 %v151
        %878 = vmatprep.subr.mxu0 0.0
        %879 = vmatpush1.msra.mxu0 %v152
        %880 = vmatprep.subr.mxu0 0.0
        %881 = vmatpush1.msra.mxu0 %v153
        %882 = vmatprep.subr.mxu0 0.0
        %883 = vmatpush1.msra.mxu0 %v154
        %884 = vmatprep.subr.mxu0 0.0
        %885 = vmatpush1.msra.mxu0 %v155
        %886 = vmatprep.subr.mxu0 0.0
        %887 = vmatpush1.msra.mxu0 %v156
        %888 = vmatprep.subr.mxu0 0.0
        %889 = vmatpush1.msra.mxu0 %v157
        %890 = vmatprep.subr.mxu0 0.0
        %891 = vmatpush1.msra.mxu0 %v158
        %892 = vmatprep.subr.mxu0 0.0
        %893 = vmatpush1.msra.mxu0 0.0
        %894 = vmatprep.subr.mxu0 0.0
        %895 = vmatpush1.msra.mxu0 0.0
        %896 = vmatprep.subr.mxu0 0.0
        %897 = vmatpush1.msra.mxu0 0.0
        %898 = vmatprep.subr.mxu0 0.0
        %899 = vmatpush1.msra.mxu0 0.0
        %900 = vmatprep.subr.mxu0 0.0
        %901 = vmatpush1.msra.mxu0 0.0
        %902 = vmatprep.subr.mxu0 0.0
        %903 = vmatpush1.msra.mxu0 0.0
        %904 = vmatprep.subr.mxu0 0.0
        %905 = vmatpush1.msra.mxu0 0.0
        %906 = vmatprep.subr.mxu0 0.0
        %907 = vmatpush1.msra.mxu0 0.0
        %908 = vmatprep.subr.mxu0 0.0
        %909 = vmatpush1.msra.mxu0 0.0
        %910 = vmatprep.subr.mxu0 0.0
        %911 = vmatpush1.msra.mxu0 0.0
        %912 = vmatprep.subr.mxu0 0.0
        %913 = vmatpush1.msra.mxu0 0.0
        %914 = vmatprep.subr.mxu0 0.0
        %915 = vmatpush1.msra.mxu0 0.0
        %916 = vmatprep.subr.mxu0 0.0
        %917 = vmatpush1.msra.mxu0 0.0
        %918 = vmatprep.subr.mxu0 0.0
        %919 = vmatpush1.msra.mxu0 0.0
        %920 = vmatprep.subr.mxu0 0.0
        %921 = vmatpush1.msra.mxu0 0.0
        %922 = vmatprep.subr.mxu0 0.0
        %923 = vmatpush1.msra.mxu0 0.0
        %924 = vmatprep.subr.mxu0 0.0
        %925 = vmatpush1.msra.mxu0 0.0
        %926 = vmatprep.subr.mxu0 0.0
        %927 = vmatpush1.msra.mxu0 0.0
        %928 = vmatprep.subr.mxu0 0.0
        %929 = vmatpush1.msra.mxu0 0.0
        %930 = vmatprep.subr.mxu0 0.0
        %931 = vmatpush1.msra.mxu0 0.0
        %932 = vmatprep.subr.mxu0 0.0
        %933 = vmatpush1.msra.mxu0 0.0
        %934 = vmatprep.subr.mxu0 0.0
        %935 = vmatpush1.msra.mxu0 0.0
        %936 = vmatprep.subr.mxu0 0.0
        %937 = vmatpush1.msra.mxu0 0.0
        %938 = vmatprep.subr.mxu0 0.0
        %939 = vmatpush1.msra.mxu0 0.0
        %940 = vmatprep.mubr.f32.mxu0 0.0
        %941 = vmatmul.mubr.f32.gmra.mrb[0].mxu0 %v871
        %v942 = vpop.f32.mrb[0].mxu0
        %v943 = vadd.f32 %v868, %v942
        %v944 = vpop.f32.mrb[0].mxu0
        %945 = vmatprep.mubr.f32.mxu0 0.0
        %946 = vmatmul.mubr.f32.gmra.mrb[0].mxu0 %v874
        %v947 = vpop.f32.mrb[0].mxu0
        %v948 = vadd.f32 %v868, %v947
        %v949 = vpop.f32.mrb[0].mxu0
        %950 = vdwg.mxu0
        %v951 = vmul.f32 %v943, 0.5
        %v952 = vmul.f32 %v948, 0.5
        %v953 = vmul.f32 %v943, 0.70710677
        %v954 = vmul.f32 %v948, 0.70710677
        %v955 = vand.u32 2147483647, %v953
        %v956 = vand.u32 2147483647, %v954
        %v957 = vmul.f32 %v955, 0.3275911
        %v958 = vmul.f32 %v956, 0.3275911
        %v959 = vadd.f32 %v957, 1.0
        %v960 = vadd.f32 %v958, 1.0
        %v961 = vrcp.pop %v959
        %v962 = vmul.f32 1.0, %v961
        %v963 = vrcp.pop %v960
        %v964 = vmul.f32 1.0, %v963
        %v965 = vmul.f32 %v962, 1.0614054
        %v966 = vmul.f32 %v964, 1.0614054
        %v967 = vadd.f32 %v965, -1.4531521
        %v968 = vadd.f32 %v966, -1.4531521
        %v969 = vmul.f32 %v967, %v962
        %v970 = vmul.f32 %v968, %v964
        %v971 = vadd.f32 %v969, 1.4214138
        %v972 = vadd.f32 %v970, 1.4214138
        %v973 = vmul.f32 %v971, %v962
        %v974 = vmul.f32 %v972, %v964
        %v975 = vadd.f32 %v973, -0.28449672
        %v976 = vadd.f32 %v974, -0.28449672
        %v977 = vmul.f32 %v975, %v962
        %v978 = vmul.f32 %v976, %v964
        %v979 = vadd.f32 %v977, 0.2548296
        %v980 = vadd.f32 %v978, 0.2548296
        %v981 = vmul.f32 %v979, %v962
        %v982 = vmul.f32 %v980, %v964
        %v983 = vsub.f32 0.0, %v955
        %v984 = vsub.f32 0.0, %v956
        %v985 = vmul.f32 %v983, %v955
        %v986 = vmul.f32 %v984, %v956
        %v987 = vmul.f32 %v985, 1.442695
        %v988 = vpow.pop %v987
        %v989 = vmul.f32 %v986, 1.442695
        %v990 = vpow.pop %v989
        %v991 = vmul.f32 %v981, %v988
        %v992 = vmul.f32 %v982, %v990
        %v993 = vsub.f32 1.0, %v991
        %v994 = vsub.f32 1.0, %v992
        %vm995 = vcmp.ge.f32.partialorder %v953, 0.0
        %vm996 = vcmp.ge.f32.partialorder %v954, 0.0
        %v997 = vsub.f32 0.0, %v993
        %v998 = vsub.f32 0.0, %v994
        %v999 = vsel %vm995, %v993, %v997
        %v1000 = vsel %vm996, %v994, %v998
        %v1001 = vadd.f32 %v999, 1.0
        %v1002 = vadd.f32 %v1000, 1.0
        %v1003 = vmul.f32 %v951, %v1001
        %v1004 = vmul.f32 %v952, %v1002
        %v1005 = vlaneseq
        %v1006 = vshrl.u32 %v1005, 7
        %v1007 = vsub.s32 0, %v1006
        %v1008 = vrot.slane %v173, %v1007
        %v1010 = vsel %vm180, %v1003, 0
        %v1013 = vsel %vm180, %v1004, 0
        %1015 = vmatprep.subr.mxu0 0.0
        %1016 = vmatpush1.msra.mxu0 %v159
        %1017 = vmatprep.subr.mxu0 0.0
        %1018 = vmatpush1.msra.mxu0 %v160
        %1019 = vmatprep.subr.mxu0 0.0
        %1020 = vmatpush1.msra.mxu0 %v161
        %1021 = vmatprep.subr.mxu0 0.0
        %1022 = vmatpush1.msra.mxu0 %v162
        %1023 = vmatprep.subr.mxu0 0.0
        %1024 = vmatpush1.msra.mxu0 0.0
        %1025 = vmatprep.subr.mxu0 0.0
        %1026 = vmatpush1.msra.mxu0 0.0
        %1027 = vmatprep.subr.mxu0 0.0
        %1028 = vmatpush1.msra.mxu0 0.0
        %1029 = vmatprep.subr.mxu0 0.0
        %1030 = vmatpush1.msra.mxu0 0.0
        %1031 = vmatprep.subr.mxu0 0.0
        %1032 = vmatpush1.msra.mxu0 0.0
        %1033 = vmatprep.subr.mxu0 0.0
        %1034 = vmatpush1.msra.mxu0 0.0
        %1035 = vmatprep.subr.mxu0 0.0
        %1036 = vmatpush1.msra.mxu0 0.0
        %1037 = vmatprep.subr.mxu0 0.0
        %1038 = vmatpush1.msra.mxu0 0.0
        %1039 = vmatprep.subr.mxu0 0.0
        %1040 = vmatpush1.msra.mxu0 0.0
        %1041 = vmatprep.subr.mxu0 0.0
        %1042 = vmatpush1.msra.mxu0 0.0
        %1043 = vmatprep.subr.mxu0 0.0
        %1044 = vmatpush1.msra.mxu0 0.0
        %1045 = vmatprep.subr.mxu0 0.0
        %1046 = vmatpush1.msra.mxu0 0.0
        %1047 = vmatprep.subr.mxu0 0.0
        %1048 = vmatpush1.msra.mxu0 0.0
        %1049 = vmatprep.subr.mxu0 0.0
        %1050 = vmatpush1.msra.mxu0 0.0
        %1051 = vmatprep.subr.mxu0 0.0
        %1052 = vmatpush1.msra.mxu0 0.0
        %1053 = vmatprep.subr.mxu0 0.0
        %1054 = vmatpush1.msra.mxu0 0.0
        %1055 = vmatprep.subr.mxu0 0.0
        %1056 = vmatpush1.msra.mxu0 0.0
        %1057 = vmatprep.subr.mxu0 0.0
        %1058 = vmatpush1.msra.mxu0 0.0
        %1059 = vmatprep.subr.mxu0 0.0
        %1060 = vmatpush1.msra.mxu0 0.0
        %1061 = vmatprep.subr.mxu0 0.0
        %1062 = vmatpush1.msra.mxu0 0.0
        %1063 = vmatprep.subr.mxu0 0.0
        %1064 = vmatpush1.msra.mxu0 0.0
        %1065 = vmatprep.subr.mxu0 0.0
        %1066 = vmatpush1.msra.mxu0 0.0
        %1067 = vmatprep.subr.mxu0 0.0
        %1068 = vmatpush1.msra.mxu0 0.0
        %1069 = vmatprep.subr.mxu0 0.0
        %1070 = vmatpush1.msra.mxu0 0.0
        %1071 = vmatprep.subr.mxu0 0.0
        %1072 = vmatpush1.msra.mxu0 0.0
        %1073 = vmatprep.subr.mxu0 0.0
        %1074 = vmatpush1.msra.mxu0 0.0
        %1075 = vmatprep.subr.mxu0 0.0
        %1076 = vmatpush1.msra.mxu0 0.0
        %1077 = vmatprep.subr.mxu0 0.0
        %1078 = vmatpush1.msra.mxu0 0.0
        %1079 = vmatprep.mubr.f32.mxu0 0.0
        %1080 = vmatmul.mubr.f32.gmra.mrb[0].mxu0 %v1010
        %v1081 = vpop.f32.mrb[0].mxu0
        %v1082 = vadd.f32 %v1008, %v1081
        %v1083 = vpop.f32.mrb[0].mxu0
        %1084 = vmatprep.mubr.f32.mxu0 0.0
        %1085 = vmatmul.mubr.f32.gmra.mrb[0].mxu0 %v1013
        %v1086 = vpop.f32.mrb[0].mxu0
        %v1087 = vadd.f32 %v1008, %v1086
        %v1088 = vpop.f32.mrb[0].mxu0
        %1089 = vdwg.mxu0
        %v1090 = vadd.f32 %v1082, %v145
        %v1091 = vadd.f32 %v1087, %v146
        %v1092 = vlaneseq
        %v1093 = vshrl.u32 %v1092, 7
        %v1094 = vsub.s32 0, %v1093
        %v1095 = vrot.slane %v174, %v1094
        %v1097 = vsel %vm180, %v1090, 0
        %v1100 = vsel %vm180, %v1091, 0
        %1102 = vmatprep.subr.mxu0 0.0
        %1103 = vmatpush1.msra.mxu0 %v163
        %1104 = vmatprep.subr.mxu0 0.0
        %1105 = vmatpush1.msra.mxu0 %v164
        %1106 = vmatprep.subr.mxu0 0.0
        %1107 = vmatpush1.msra.mxu0 %v165
        %1108 = vmatprep.subr.mxu0 0.0
        %1109 = vmatpush1.msra.mxu0 %v166
        %1110 = vmatprep.subr.mxu0 0.0
        %1111 = vmatpush1.msra.mxu0 0.0
        %1112 = vmatprep.subr.mxu0 0.0
        %1113 = vmatpush1.msra.mxu0 0.0
        %1114 = vmatprep.subr.mxu0 0.0
        %1115 = vmatpush1.msra.mxu0 0.0
        %1116 = vmatprep.subr.mxu0 0.0
        %1117 = vmatpush1.msra.mxu0 0.0
        %1118 = vmatprep.subr.mxu0 0.0
        %1119 = vmatpush1.msra.mxu0 0.0
        %1120 = vmatprep.subr.mxu0 0.0
        %1121 = vmatpush1.msra.mxu0 0.0
        %1122 = vmatprep.subr.mxu0 0.0
        %1123 = vmatpush1.msra.mxu0 0.0
        %1124 = vmatprep.subr.mxu0 0.0
        %1125 = vmatpush1.msra.mxu0 0.0
        %1126 = vmatprep.subr.mxu0 0.0
        %1127 = vmatpush1.msra.mxu0 0.0
        %1128 = vmatprep.subr.mxu0 0.0
        %1129 = vmatpush1.msra.mxu0 0.0
        %1130 = vmatprep.subr.mxu0 0.0
        %1131 = vmatpush1.msra.mxu0 0.0
        %1132 = vmatprep.subr.mxu0 0.0
        %1133 = vmatpush1.msra.mxu0 0.0
        %1134 = vmatprep.subr.mxu0 0.0
        %1135 = vmatpush1.msra.mxu0 0.0
        %1136 = vmatprep.subr.mxu0 0.0
        %1137 = vmatpush1.msra.mxu0 0.0
        %1138 = vmatprep.subr.mxu0 0.0
        %1139 = vmatpush1.msra.mxu0 0.0
        %1140 = vmatprep.subr.mxu0 0.0
        %1141 = vmatpush1.msra.mxu0 0.0
        %1142 = vmatprep.subr.mxu0 0.0
        %1143 = vmatpush1.msra.mxu0 0.0
        %1144 = vmatprep.subr.mxu0 0.0
        %1145 = vmatpush1.msra.mxu0 0.0
        %1146 = vmatprep.subr.mxu0 0.0
        %1147 = vmatpush1.msra.mxu0 0.0
        %1148 = vmatprep.subr.mxu0 0.0
        %1149 = vmatpush1.msra.mxu0 0.0
        %1150 = vmatprep.subr.mxu0 0.0
        %1151 = vmatpush1.msra.mxu0 0.0
        %1152 = vmatprep.subr.mxu0 0.0
        %1153 = vmatpush1.msra.mxu0 0.0
        %1154 = vmatprep.subr.mxu0 0.0
        %1155 = vmatpush1.msra.mxu0 0.0
        %1156 = vmatprep.subr.mxu0 0.0
        %1157 = vmatpush1.msra.mxu0 0.0
        %1158 = vmatprep.subr.mxu0 0.0
        %1159 = vmatpush1.msra.mxu0 0.0
        %1160 = vmatprep.subr.mxu0 0.0
        %1161 = vmatpush1.msra.mxu0 0.0
        %1162 = vmatprep.subr.mxu0 0.0
        %1163 = vmatpush1.msra.mxu0 0.0
        %1164 = vmatprep.subr.mxu0 0.0
        %1165 = vmatpush1.msra.mxu0 0.0
        %1166 = vmatprep.mubr.f32.mxu0 0.0
        %1167 = vmatmul.mubr.f32.gmra.mrb[0].mxu0 %v1097
        %v1168 = vpop.f32.mrb[0].mxu0
        %v1169 = vadd.f32 %v1095, %v1168
        %v1170 = vpop.f32.mrb[0].mxu0
        %1171 = vmatprep.mubr.f32.mxu0 0.0
        %1172 = vmatmul.mubr.f32.gmra.mrb[0].mxu0 %v1100
        %v1173 = vpop.f32.mrb[0].mxu0
        %v1174 = vadd.f32 %v1095, %v1173
        %v1175 = vpop.f32.mrb[0].mxu0
        %1176 = vdwg.mxu0
        %v1177 = vmul.f32 %v1169, 0.5
        %v1178 = vmul.f32 %v1174, 0.5
        %v1179 = vmul.f32 %v1169, 0.70710677
        %v1180 = vmul.f32 %v1174, 0.70710677
        %v1181 = vand.u32 2147483647, %v1179
        %v1182 = vand.u32 2147483647, %v1180
        %v1183 = vmul.f32 %v1181, 0.3275911
        %v1184 = vmul.f32 %v1182, 0.3275911
        %v1185 = vadd.f32 %v1183, 1.0
        %v1186 = vadd.f32 %v1184, 1.0
        %v1187 = vrcp.pop %v1185
        %v1188 = vmul.f32 1.0, %v1187
        %v1189 = vrcp.pop %v1186
        %v1190 = vmul.f32 1.0, %v1189
        %v1191 = vmul.f32 %v1188, 1.0614054
        %v1192 = vmul.f32 %v1190, 1.0614054
        %v1193 = vadd.f32 %v1191, -1.4531521
        %v1194 = vadd.f32 %v1192, -1.4531521
        %v1195 = vmul.f32 %v1193, %v1188
        %v1196 = vmul.f32 %v1194, %v1190
        %v1197 = vadd.f32 %v1195, 1.4214138
        %v1198 = vadd.f32 %v1196, 1.4214138
        %v1199 = vmul.f32 %v1197, %v1188
        %v1200 = vmul.f32 %v1198, %v1190
        %v1201 = vadd.f32 %v1199, -0.28449672
        %v1202 = vadd.f32 %v1200, -0.28449672
        %v1203 = vmul.f32 %v1201, %v1188
        %v1204 = vmul.f32 %v1202, %v1190
        %v1205 = vadd.f32 %v1203, 0.2548296
        %v1206 = vadd.f32 %v1204, 0.2548296
        %v1207 = vmul.f32 %v1205, %v1188
        %v1208 = vmul.f32 %v1206, %v1190
        %v1209 = vsub.f32 0.0, %v1181
        %v1210 = vsub.f32 0.0, %v1182
        %v1211 = vmul.f32 %v1209, %v1181
        %v1212 = vmul.f32 %v1210, %v1182
        %v1213 = vmul.f32 %v1211, 1.442695
        %v1214 = vpow.pop %v1213
        %v1215 = vmul.f32 %v1212, 1.442695
        %v1216 = vpow.pop %v1215
        %v1217 = vmul.f32 %v1207, %v1214
        %v1218 = vmul.f32 %v1208, %v1216
        %v1219 = vsub.f32 1.0, %v1217
        %v1220 = vsub.f32 1.0, %v1218
        %vm1221 = vcmp.ge.f32.partialorder %v1179, 0.0
        %vm1222 = vcmp.ge.f32.partialorder %v1180, 0.0
        %v1223 = vsub.f32 0.0, %v1219
        %v1224 = vsub.f32 0.0, %v1220
        %v1225 = vsel %vm1221, %v1219, %v1223
        %v1226 = vsel %vm1222, %v1220, %v1224
        %v1227 = vadd.f32 %v1225, 1.0
        %v1228 = vadd.f32 %v1226, 1.0
        %v1229 = vmul.f32 %v1177, %v1227
        %v1230 = vmul.f32 %v1178, %v1228
        %v1231 = vlaneseq
        %v1232 = vshrl.u32 %v1231, 7
        %v1233 = vsub.s32 0, %v1232
        %v1234 = vrot.slane %v175, %v1233
        %v1236 = vsel %vm180, %v1229, 0
        %v1239 = vsel %vm180, %v1230, 0
        %1241 = vmatprep.subr.mxu0 0.0
        %1242 = vmatpush1.msra.mxu0 %v167
        %1243 = vmatprep.subr.mxu0 0.0
        %1244 = vmatpush1.msra.mxu0 %v168
        %1245 = vmatprep.subr.mxu0 0.0
        %1246 = vmatpush1.msra.mxu0 %v169
        %1247 = vmatprep.subr.mxu0 0.0
        %1248 = vmatpush1.msra.mxu0 %v170
        %1249 = vmatprep.subr.mxu0 0.0
        %1250 = vmatpush1.msra.mxu0 0.0
        %1251 = vmatprep.subr.mxu0 0.0
        %1252 = vmatpush1.msra.mxu0 0.0
        %1253 = vmatprep.subr.mxu0 0.0
        %1254 = vmatpush1.msra.mxu0 0.0
        %1255 = vmatprep.subr.mxu0 0.0
        %1256 = vmatpush1.msra.mxu0 0.0
        %1257 = vmatprep.subr.mxu0 0.0
        %1258 = vmatpush1.msra.mxu0 0.0
        %1259 = vmatprep.subr.mxu0 0.0
        %1260 = vmatpush1.msra.mxu0 0.0
        %1261 = vmatprep.subr.mxu0 0.0
        %1262 = vmatpush1.msra.mxu0 0.0
        %1263 = vmatprep.subr.mxu0 0.0
        %1264 = vmatpush1.msra.mxu0 0.0
        %1265 = vmatprep.subr.mxu0 0.0
        %1266 = vmatpush1.msra.mxu0 0.0
        %1267 = vmatprep.subr.mxu0 0.0
        %1268 = vmatpush1.msra.mxu0 0.0
        %1269 = vmatprep.subr.mxu0 0.0
        %1270 = vmatpush1.msra.mxu0 0.0
        %1271 = vmatprep.subr.mxu0 0.0
        %1272 = vmatpush1.msra.mxu0 0.0
        %1273 = vmatprep.subr.mxu0 0.0
        %1274 = vmatpush1.msra.mxu0 0.0
        %1275 = vmatprep.subr.mxu0 0.0
        %1276 = vmatpush1.msra.mxu0 0.0
        %1277 = vmatprep.subr.mxu0 0.0
        %1278 = vmatpush1.msra.mxu0 0.0
        %1279 = vmatprep.subr.mxu0 0.0
        %1280 = vmatpush1.msra.mxu0 0.0
        %1281 = vmatprep.subr.mxu0 0.0
        %1282 = vmatpush1.msra.mxu0 0.0
        %1283 = vmatprep.subr.mxu0 0.0
        %1284 = vmatpush1.msra.mxu0 0.0
        %1285 = vmatprep.subr.mxu0 0.0
        %1286 = vmatpush1.msra.mxu0 0.0
        %1287 = vmatprep.subr.mxu0 0.0
        %1288 = vmatpush1.msra.mxu0 0.0
        %1289 = vmatprep.subr.mxu0 0.0
        %1290 = vmatpush1.msra.mxu0 0.0
        %1291 = vmatprep.subr.mxu0 0.0
        %1292 = vmatpush1.msra.mxu0 0.0
        %1293 = vmatprep.subr.mxu0 0.0
        %1294 = vmatpush1.msra.mxu0 0.0
        %1295 = vmatprep.subr.mxu0 0.0
        %1296 = vmatpush1.msra.mxu0 0.0
        %1297 = vmatprep.subr.mxu0 0.0
        %1298 = vmatpush1.msra.mxu0 0.0
        %1299 = vmatprep.subr.mxu0 0.0
        %1300 = vmatpush1.msra.mxu0 0.0
        %1301 = vmatprep.subr.mxu0 0.0
        %1302 = vmatpush1.msra.mxu0 0.0
        %1303 = vmatprep.subr.mxu0 0.0
        %1304 = vmatpush1.msra.mxu0 0.0
        %1305 = vmatprep.mubr.f32.mxu0 0.0
        %1306 = vmatmul.mubr.f32.gmra.mrb[0].mxu0 %v1236
        %v1307 = vpop.f32.mrb[0].mxu0
        %v1308 = vadd.f32 %v1234, %v1307
        %v1309 = vpop.f32.mrb[0].mxu0
        %1310 = vmatprep.mubr.f32.mxu0 0.0
        %1311 = vmatmul.mubr.f32.gmra.mrb[0].mxu0 %v1239
        %v1312 = vpop.f32.mrb[0].mxu0
        %v1313 = vadd.f32 %v1234, %v1312
        %v1314 = vpop.f32.mrb[0].mxu0
        %1315 = vdwg.mxu0
        %v1316 = vadd.f32 %v1308, %v1090
        %v1317 = vadd.f32 %v1313, %v1091
        %1318 = vst.msk [vmem:[%s137] sm:$0xff] %vm180, %v1316
        %1319 = vst.msk [vmem:[%s137 + $0x8] sm:$0xff] %vm180, %v1317
        %s1320 = sand.u32 %s71, 1
        %s1321 = scalar_lea.sflag [#allocation3], %s1320
        %s1322 = sand.u32 %s71, 1
        %s1323 = smul.addr %s1322, 16
        %s1324 = scalar_lea.vmem [#allocation2], %s1323
        // Predicated region
        $region29: #{tpu_custom_call.1} parent=27 // pred_check
          %p1325 = pneg %p81
        $region30: #{tpu_custom_call.1} parent=27 // pred_check_branch
          %1327 = sbr.rel (%p1325) target = $region32
        $region31: #{tpu_custom_call.1} parent=27 // pred_region
          %s1328 = smul.u32 2, %s16
          %s1330 = ssub.s32 256, 256
          %1331 = vsyncadd %s1321, %s1330
          %s1332 = smul.addr %s1328, 128
          %s1333 = scalar_lea.hbm %s2, %s1332
          %s1334 = sshll.u32 %s1324, 4
          %s1335 = int_to_ptr.vmem [resolvable:$true] %s1334
          %1340 = dma.vmem_to_hbm [thread:$0]  %s1335, 256, %s1333, %s1321, 128, 128, 8
        $region32: #{tpu_custom_call.1} parent=27 // pred_fallthru
          _
      $region28: #{tpu_custom_call.1} parent=5 // pred_fallthru
        _
      %p1341 = scmp.le.s32.totalorder 2, %s11
      // Predicated region
      $region33: #{tpu_custom_call.1} parent=5 // pred_check
        %p1342 = pneg %p1341
      $region34: #{tpu_custom_call.1} parent=5 // pred_check_branch
        %1344 = sbr.rel (%p1342) target = $region36
      $region35: #{tpu_custom_call.1} parent=5 // pred_region
        %s1345 = ssub.s32 %s11, 2
        // Predicated region
        $region37: #{tpu_custom_call.1} parent=35 // pred_check
          %p1346 = pneg %p87
        $region38: #{tpu_custom_call.1} parent=35 // pred_check_branch
          %1348 = sbr.rel (%p1346) target = $region40
        $region39: #{tpu_custom_call.1} parent=35 // pred_region
          %s1349 = sand.u32 %s72, 1
          %s1350 = scalar_lea.sflag [#allocation3], %s1349
          %s1351 = sand.u32 %s72, 1
          %s1352 = smul.addr %s1351, 16
          %s1353 = scalar_lea.vmem [#allocation2], %s1352
          %1354 = dma.done %s1350, 256
        $region40: #{tpu_custom_call.1} parent=35 // pred_fallthru
          _
      $region36: #{tpu_custom_call.1} parent=5 // pred_fallthru
        _
    $region6: #{tpu_custom_call.1} parent=1 // loop_footer
      %s15 = sadd.s32 1, %s11
    $region7: #{tpu_custom_call.1} parent=1 // loop_footer_branch
      %10 = sbr.rel target = $region3
    $region8: #{tpu_custom_call.1} parent=1 // loop_exit
      _
    %1355 = vsyncpa [#allocation3], 1
    %s1356 = scalar_lea.sflag [#allocation3], 1
    %1357 = vsyncpa %s1356, 1

</llo_original>
